<compile_context>
chip_gen: v6e
topology: v6e:2x2x1
jax: 0.10.0
libtpu: 0.0.40
codegen_flags: <defaults>
</compile_context>

<pallas_src>
import functools

import jax
import jax.numpy as jnp
from jax.experimental import pallas as pl
from jax.experimental.pallas import tpu as pltpu


def _mrconv_kernel(*refs, has_y):
    """One (batch, N-tile) grid step.

    Refs (channels-major, point axis padded to a multiple of 128):
      x_ref    : (1, C, Npad)   bf16   gather source + conv input
      [y_ref]  : (1, C, Npad)   bf16   optional neighbor-feature source
      idxj_ref : (1, K, tn)     i32    neighbor indices for this output tile
      idxi_ref : (1, K, tn)     i32    center indices for this output tile
      w_ref    : (Cout, 2C)     bf16   [wxT | wmT] folded grouped 1x1 conv
      b_ref    : (Cout, 1)      f32    bias
      o_ref    : (1, Cout, tn)  f32
    """
    if has_y:
        x_ref, y_ref, idxj_ref, idxi_ref, w_ref, b_ref, o_ref = refs
    else:
        x_ref, idxj_ref, idxi_ref, w_ref, b_ref, o_ref = refs

    x = x_ref[0]                           # (C, Npad) bf16
    idx_j = idxj_ref[0]                    # (K, tn) i32
    idx_i = idxi_ref[0]                    # (K, tn) i32
    k, tn = idx_j.shape
    n_src = x.shape[-1]

    # Source-point index along the sublane (contraction) axis of the one-hot
    # selection matrix.
    iota_src = jax.lax.broadcasted_iota(jnp.int32, (n_src, tn), 0)

    # Build ONE wide selection matrix so the K gathers become a single MXU
    # matmul with a lane-dense (C, K*tn) result, instead of K tiny matmuls.
    # Compares / subtract stay in f32 (VPU); only the MXU operand is bf16
    # ({-1,0,+1} is exact in bf16).
    # TODO(synk): for very large N (ViG stage-1, N~3136) a scalar-prefetch /
    # DMA row-gather would beat the O(K*N*tn) one-hot matmul; the one-hot path
    # is kept for small/medium N.
    cols = []
    for kk in range(k):                    # K is small & static -> unrolled
        eq_j = (iota_src == idx_j[kk:kk + 1, :]).astype(jnp.float32)
        eq_i = (iota_src == idx_i[kk:kk + 1, :]).astype(jnp.float32)
        if has_y:
            # [y | x] @ [onehot_j ; -onehot_i]  ==  y[j] - x[i]
            cols.append(jnp.concatenate([eq_j, -eq_i], axis=0).astype(jnp.bfloat16))
        else:
            # x @ (onehot_j - onehot_i)  ==  x[j] - x[i]   (fused gather-sub)
            cols.append((eq_j - eq_i).astype(jnp.bfloat16))
    sel = jnp.concatenate(cols, axis=-1)   # (Npad or 2*Npad, K*tn) bf16

    lhs = jnp.concatenate([y_ref[0], x], axis=-1) if has_y else x
    d_all = jnp.dot(lhs, sel, preferred_element_type=jnp.float32)   # (C, K*tn)

    # max over the K lane-aligned column slices (f32, VPU).
    maxrel = d_all[:, 0:tn]
    for kk in range(1, k):
        maxrel = jnp.maximum(maxrel, d_all[:, kk * tn:(kk + 1) * tn])

    # Merged grouped 1x1 conv:  out = [wxT | wmT] @ [x_tile ; maxrel] + bias.
    col0 = pl.multiple_of(pl.program_id(1) * tn, 128)
    x_tile = x_ref[0, :, pl.ds(col0, tn)]                           # (C, tn) bf16
    feat = jnp.concatenate([x_tile, maxrel.astype(jnp.bfloat16)], axis=0)
    out = jnp.dot(w_ref[...], feat, preferred_element_type=jnp.float32)
    out = out + b_ref[...]                                          # (Cout, tn)

    # GELU activation (tanh form -> EUP).
    # TODO(synk): PyTorch nn.GELU defaults to exact erf; norm_cfg / Dropout2d
    # branches of BasicConv are not ported (fold BN into weight/bias upstream).
    c0 = 0.7978845608028654               # sqrt(2/pi)
    out = 0.5 * out * (1.0 + jnp.tanh(c0 * (out + 0.044715 * out * out * out)))

    o_ref[0] = out.astype(o_ref.dtype)


def _grouped_conv_weights(weight, groups, in_channels):
    """Fold grouped 1x1 conv + channel interleave into two dense matrices.

    weight: (Cout, 2C // groups)  (1x1 kernel squeezed)
    Returns (wxT, wmT) each of shape (Cout, C) such that, channels-major,
      conv(interleave(x, m)) == wxT @ x + wmT @ m.
    """
    c = in_channels
    cout, cin_g = weight.shape
    cin = 2 * c
    assert cin_g * groups == cin and cout % groups == 0
    cout_g = cout // groups
    wfull = jnp.zeros((cin, cout), weight.dtype)       # block-diagonal (2C, Cout)
    for g in range(groups):
        wfull = wfull.at[g * cin_g:(g + 1) * cin_g,
                         g * cout_g:(g + 1) * cout_g].set(
            weight[g * cout_g:(g + 1) * cout_g, :].T)
    wx = wfull[0::2, :]              # even interleave slots -> x channels
    wm = wfull[1::2, :]              # odd interleave slots  -> max-relative
    return wx.T, wm.T                # (Cout, C) each


def mrconv2d(x, edge_index, weight, bias, *, groups=4, y=None, tile_n=None):
    """MRConv2d.forward.

    x:          (B, C, N, 1) float
    edge_index: (2, B, N, K) int   ([0]=neighbor ids, [1]=center ids)
    weight:     (Cout, 2C//groups) or (Cout, 2C//groups, 1, 1)
    bias:       (Cout,) or None
    y:          optional (B, C, N, 1)
    returns:    (B, Cout, N, 1) float32
    """
    b, c, n, _ = x.shape
    _, _, _, k = edge_index.shape
    if weight.ndim == 4:
        weight = weight[:, :, 0, 0]
    cout = weight.shape[0]

    # Lane-dense layout: pad the point axis up to a multiple of 128 so every
    # load / store is an unmasked full-lane op; padded tail is sliced off.
    n_pad = ((n + 127) // 128) * 128
    if tile_n is None:
        tile_n = 128
        for cand in (512, 384, 256, 128):
            if n_pad % cand == 0:
                tile_n = cand
                break
    assert tile_n % 128 == 0 and n_pad % tile_n == 0
    ntiles = n_pad // tile_n

    def pad_n(a):
        p = n_pad - a.shape[-1]
        return a if p == 0 else jnp.pad(a, [(0, 0)] * (a.ndim - 1) + [(0, p)])

    # bf16 MXU feeds (halves HBM->VMEM traffic); accumulation stays f32.
    x_cm = pad_n(x[..., 0].astype(jnp.bfloat16))                           # (B,C,Np)
    idx_j = pad_n(jnp.transpose(edge_index[0], (0, 2, 1)).astype(jnp.int32))  # (B,K,Np)
    idx_i = pad_n(jnp.transpose(edge_index[1], (0, 2, 1)).astype(jnp.int32))  # (B,K,Np)

    wxT, wmT = _grouped_conv_weights(weight.astype(jnp.float32), groups, c)
    w_full = jnp.concatenate([wxT, wmT], axis=1).astype(jnp.bfloat16)      # (Cout,2C)
    if bias is None:
        bias = jnp.zeros((cout,), jnp.float32)
    bias2d = bias.astype(jnp.float32).reshape(cout, 1)

    has_y = y is not None
    operands = [x_cm]
    in_specs = [pl.BlockSpec((1, c, n_pad), lambda i, j: (i, 0, 0))]
    if has_y:
        operands.append(pad_n(y[..., 0].astype(jnp.bfloat16)))
        in_specs.append(pl.BlockSpec((1, c, n_pad), lambda i, j: (i, 0, 0)))
    operands += [idx_j, idx_i, w_full, bias2d]
    in_specs += [
        pl.BlockSpec((1, k, tile_n), lambda i, j: (i, 0, j)),
        pl.BlockSpec((1, k, tile_n), lambda i, j: (i, 0, j)),
        pl.BlockSpec((cout, 2 * c), lambda i, j: (0, 0)),   # shared across grid
        pl.BlockSpec((cout, 1), lambda i, j: (0, 0)),
    ]

    out = pl.pallas_call(
        functools.partial(_mrconv_kernel, has_y=has_y),
        out_shape=jax.ShapeDtypeStruct((b, cout, n_pad), jnp.float32),
        grid_spec=pltpu.PrefetchScalarGridSpec(
            num_scalar_prefetch=0,
            grid=(b, ntiles),
            in_specs=in_specs,
            out_specs=pl.BlockSpec((1, cout, tile_n), lambda i, j: (i, 0, j)),
        ),
        compiler_params=pltpu.CompilerParams(
            dimension_semantics=("parallel", "parallel")),
    )(*operands)

    return out[:, :, :n, None]                                             # (B,Cout,N,1)


def _reference(x, edge_index, weight, bias, *, groups=4, y=None):
    """Pure-JAX reference mirroring the PyTorch forward (tanh GELU) with the
    kernel's bf16 quantization of MXU operands."""
    b, c, n, _ = x.shape
    if weight.ndim == 4:
        weight = weight[:, :, 0, 0]
    cout = weight.shape[0]
    f32 = jnp.float32
    xq = x[..., 0].astype(jnp.bfloat16).astype(f32)
    yq = xq if y is None else y[..., 0].astype(jnp.bfloat16).astype(f32)
    wq = weight.astype(jnp.bfloat16).astype(f32)

    def gather(feat, idx):           # (C, N), (N, K) -> (C, N, K)
        return feat[:, idx]

    x_j = jax.vmap(gather)(yq, edge_index[0])        # (B, C, N, K)
    x_i = jax.vmap(gather)(xq, edge_index[1])
    maxrel = jnp.max(x_j - x_i, axis=-1)             # (B, C, N)
    maxrel = maxrel.astype(jnp.bfloat16).astype(f32)
    feat = jnp.stack([xq, maxrel], axis=2).reshape(b, 2 * c, n)

    cin_g = 2 * c // groups
    cout_g = cout // groups
    outs = []
    for g in range(groups):
        fg = feat[:, g * cin_g:(g + 1) * cin_g, :]
        wg = wq[g * cout_g:(g + 1) * cout_g, :]
        outs.append(jnp.einsum('oc,bcn->bon', wg, fg))
    out = jnp.concatenate(outs, axis=1) + bias.astype(f32)[None, :, None]
    c0 = 0.7978845608028654
    out = 0.5 * out * (1.0 + jnp.tanh(c0 * (out + 0.044715 * out ** 3)))
    return out[..., None]


if __name__ == "__main__":
    key = jax.random.PRNGKey(0)
    B, C, N, K = 2, 8, 64, 9          # 64 points ~ an 8x8 grid, flattened
    COUT, GROUPS = 16, 4

    kx, ky, kw, kb, ki = jax.random.split(key, 5)
    x = jax.random.normal(kx, (B, C, N, 1), dtype=jnp.float32)
    yfeat = jax.random.normal(ky, (B, C, N, 1), dtype=jnp.float32)
    weight = 0.1 * jax.random.normal(kw, (COUT, 2 * C // GROUPS), dtype=jnp.float32)
    bias = 0.1 * jax.random.normal(kb, (COUT,), dtype=jnp.float32)

    nn_idx = jax.random.randint(ki, (B, N, K), 0, N, dtype=jnp.int32)
    center_idx = jnp.broadcast_to(
        jnp.arange(N, dtype=jnp.int32)[None, :, None], (B, N, K))
    edge_index = jnp.stack([nn_idx, center_idx], axis=0)     # (2, B, N, K)

    # y = None path (fused gather-subtract).
    out = mrconv2d(x, edge_index, weight, bias, groups=GROUPS)
    out = jax.block_until_ready(out)
    assert out.shape == (B, COUT, N, 1), out.shape
    ref = _reference(x, edge_index, weight, bias, groups=GROUPS)
    err = float(jnp.max(jnp.abs(out - ref)))
    assert err < 2e-3, f"max abs err (y=None) {err}"

    # y provided path.
    out_y = mrconv2d(x, edge_index, weight, bias, groups=GROUPS, y=yfeat)
    out_y = jax.block_until_ready(out_y)
    ref_y = _reference(x, edge_index, weight, bias, groups=GROUPS, y=yfeat)
    err_y = float(jnp.max(jnp.abs(out_y - ref_y)))
    assert err_y < 2e-3, f"max abs err (y given) {err_y}"

    print("KERNEL_OK")
</pallas_src>

<mosaic_0001>
module attributes {stable_mosaic.version = 11 : i64} {
  func.func @_mrconv_kernel(%arg0: i32, %arg1: i32, %arg2: memref<1x8x128xbf16, #tpu.memory_space<vmem>>, %arg3: memref<1x9x128xi32, #tpu.memory_space<vmem>>, %arg4: memref<1x9x128xi32, #tpu.memory_space<vmem>>, %arg5: memref<16x16xbf16, #tpu.memory_space<vmem>>, %arg6: memref<16x1xf32, #tpu.memory_space<vmem>>, %arg7: memref<1x16x128xf32, #tpu.memory_space<vmem>>) attributes {dimension_semantics = [#tpu.dimension_semantics<parallel>, #tpu.dimension_semantics<parallel>], iteration_bounds = array<i64: 2, 1>, scalar_prefetch = 0 : i64, scratch_operands = 0 : i64, tpu.core_type = #tpu.core_type<tc>, window_params = [{transform_indices = @transform_0, window_bounds = array<i64: 1, 8, 128>}, {transform_indices = @transform_1, window_bounds = array<i64: 1, 9, 128>}, {transform_indices = @transform_2, window_bounds = array<i64: 1, 9, 128>}, {pipeline_mode = #tpu.pipeline_mode<synchronous>, transform_indices = @transform_3, window_bounds = array<i64: 16, 16>}, {pipeline_mode = #tpu.pipeline_mode<synchronous>, transform_indices = @transform_4, window_bounds = array<i64: 16, 1>}, {transform_indices = @transform_5, window_bounds = array<i64: 1, 16, 128>}]} {
    %c0 = arith.constant 0 : index
    %c0_0 = arith.constant 0 : index
    %c0_1 = arith.constant 0 : index
    %0 = vector.load %arg2[%c0, %c0_0, %c0_1] : memref<1x8x128xbf16, #tpu.memory_space<vmem>>, vector<1x8x128xbf16>
    %1 = vector.shape_cast %0 : vector<1x8x128xbf16> to vector<8x128xbf16>
    %c0_2 = arith.constant 0 : index
    %c0_3 = arith.constant 0 : index
    %c0_4 = arith.constant 0 : index
    %2 = vector.load %arg3[%c0_2, %c0_3, %c0_4] : memref<1x9x128xi32, #tpu.memory_space<vmem>>, vector<1x9x128xi32>
    %3 = vector.shape_cast %2 : vector<1x9x128xi32> to vector<9x128xi32>
    %c0_5 = arith.constant 0 : index
    %c0_6 = arith.constant 0 : index
    %c0_7 = arith.constant 0 : index
    %4 = vector.load %arg4[%c0_5, %c0_6, %c0_7] : memref<1x9x128xi32, #tpu.memory_space<vmem>>, vector<1x9x128xi32>
    %5 = vector.shape_cast %4 : vector<1x9x128xi32> to vector<9x128xi32>
    %6 = tpu.iota {dimensions = array<i32: 0>} : vector<128x128xi32>
    %7 = vector.extract_strided_slice %3 {offsets = [0, 0], sizes = [1, 128], strides = [1, 1]} : vector<9x128xi32> to vector<1x128xi32>
    %8 = vector.broadcast %7 : vector<1x128xi32> to vector<128x128xi32>
    %9 = arith.cmpi eq, %6, %8 : vector<128x128xi32>
    %10 = arith.extui %9 : vector<128x128xi1> to vector<128x128xi32>
    %11 = arith.sitofp %10 : vector<128x128xi32> to vector<128x128xf32>
    %12 = vector.extract_strided_slice %5 {offsets = [0, 0], sizes = [1, 128], strides = [1, 1]} : vector<9x128xi32> to vector<1x128xi32>
    %13 = vector.broadcast %12 : vector<1x128xi32> to vector<128x128xi32>
    %14 = arith.cmpi eq, %6, %13 : vector<128x128xi32>
    %15 = arith.extui %14 : vector<128x128xi1> to vector<128x128xi32>
    %16 = arith.sitofp %15 : vector<128x128xi32> to vector<128x128xf32>
    %17 = arith.subf %11, %16 : vector<128x128xf32>
    %18 = arith.truncf %17 : vector<128x128xf32> to vector<128x128xbf16>
    %19 = vector.extract_strided_slice %3 {offsets = [1, 0], sizes = [1, 128], strides = [1, 1]} : vector<9x128xi32> to vector<1x128xi32>
    %20 = vector.broadcast %19 : vector<1x128xi32> to vector<128x128xi32>
    %21 = arith.cmpi eq, %6, %20 : vector<128x128xi32>
    %22 = arith.extui %21 : vector<128x128xi1> to vector<128x128xi32>
    %23 = arith.sitofp %22 : vector<128x128xi32> to vector<128x128xf32>
    %24 = vector.extract_strided_slice %5 {offsets = [1, 0], sizes = [1, 128], strides = [1, 1]} : vector<9x128xi32> to vector<1x128xi32>
    %25 = vector.broadcast %24 : vector<1x128xi32> to vector<128x128xi32>
    %26 = arith.cmpi eq, %6, %25 : vector<128x128xi32>
    %27 = arith.extui %26 : vector<128x128xi1> to vector<128x128xi32>
    %28 = arith.sitofp %27 : vector<128x128xi32> to vector<128x128xf32>
    %29 = arith.subf %23, %28 : vector<128x128xf32>
    %30 = arith.truncf %29 : vector<128x128xf32> to vector<128x128xbf16>
    %31 = vector.extract_strided_slice %3 {offsets = [2, 0], sizes = [1, 128], strides = [1, 1]} : vector<9x128xi32> to vector<1x128xi32>
    %32 = vector.broadcast %31 : vector<1x128xi32> to vector<128x128xi32>
    %33 = arith.cmpi eq, %6, %32 : vector<128x128xi32>
    %34 = arith.extui %33 : vector<128x128xi1> to vector<128x128xi32>
    %35 = arith.sitofp %34 : vector<128x128xi32> to vector<128x128xf32>
    %36 = vector.extract_strided_slice %5 {offsets = [2, 0], sizes = [1, 128], strides = [1, 1]} : vector<9x128xi32> to vector<1x128xi32>
    %37 = vector.broadcast %36 : vector<1x128xi32> to vector<128x128xi32>
    %38 = arith.cmpi eq, %6, %37 : vector<128x128xi32>
    %39 = arith.extui %38 : vector<128x128xi1> to vector<128x128xi32>
    %40 = arith.sitofp %39 : vector<128x128xi32> to vector<128x128xf32>
    %41 = arith.subf %35, %40 : vector<128x128xf32>
    %42 = arith.truncf %41 : vector<128x128xf32> to vector<128x128xbf16>
    %43 = vector.extract_strided_slice %3 {offsets = [3, 0], sizes = [1, 128], strides = [1, 1]} : vector<9x128xi32> to vector<1x128xi32>
    %44 = vector.broadcast %43 : vector<1x128xi32> to vector<128x128xi32>
    %45 = arith.cmpi eq, %6, %44 : vector<128x128xi32>
    %46 = arith.extui %45 : vector<128x128xi1> to vector<128x128xi32>
    %47 = arith.sitofp %46 : vector<128x128xi32> to vector<128x128xf32>
    %48 = vector.extract_strided_slice %5 {offsets = [3, 0], sizes = [1, 128], strides = [1, 1]} : vector<9x128xi32> to vector<1x128xi32>
    %49 = vector.broadcast %48 : vector<1x128xi32> to vector<128x128xi32>
    %50 = arith.cmpi eq, %6, %49 : vector<128x128xi32>
    %51 = arith.extui %50 : vector<128x128xi1> to vector<128x128xi32>
    %52 = arith.sitofp %51 : vector<128x128xi32> to vector<128x128xf32>
    %53 = arith.subf %47, %52 : vector<128x128xf32>
    %54 = arith.truncf %53 : vector<128x128xf32> to vector<128x128xbf16>
    %55 = vector.extract_strided_slice %3 {offsets = [4, 0], sizes = [1, 128], strides = [1, 1]} : vector<9x128xi32> to vector<1x128xi32>
    %56 = vector.broadcast %55 : vector<1x128xi32> to vector<128x128xi32>
    %57 = arith.cmpi eq, %6, %56 : vector<128x128xi32>
    %58 = arith.extui %57 : vector<128x128xi1> to vector<128x128xi32>
    %59 = arith.sitofp %58 : vector<128x128xi32> to vector<128x128xf32>
    %60 = vector.extract_strided_slice %5 {offsets = [4, 0], sizes = [1, 128], strides = [1, 1]} : vector<9x128xi32> to vector<1x128xi32>
    %61 = vector.broadcast %60 : vector<1x128xi32> to vector<128x128xi32>
    %62 = arith.cmpi eq, %6, %61 : vector<128x128xi32>
    %63 = arith.extui %62 : vector<128x128xi1> to vector<128x128xi32>
    %64 = arith.sitofp %63 : vector<128x128xi32> to vector<128x128xf32>
    %65 = arith.subf %59, %64 : vector<128x128xf32>
    %66 = arith.truncf %65 : vector<128x128xf32> to vector<128x128xbf16>
    %67 = vector.extract_strided_slice %3 {offsets = [5, 0], sizes = [1, 128], strides = [1, 1]} : vector<9x128xi32> to vector<1x128xi32>
    %68 = vector.broadcast %67 : vector<1x128xi32> to vector<128x128xi32>
    %69 = arith.cmpi eq, %6, %68 : vector<128x128xi32>
    %70 = arith.extui %69 : vector<128x128xi1> to vector<128x128xi32>
    %71 = arith.sitofp %70 : vector<128x128xi32> to vector<128x128xf32>
    %72 = vector.extract_strided_slice %5 {offsets = [5, 0], sizes = [1, 128], strides = [1, 1]} : vector<9x128xi32> to vector<1x128xi32>
    %73 = vector.broadcast %72 : vector<1x128xi32> to vector<128x128xi32>
    %74 = arith.cmpi eq, %6, %73 : vector<128x128xi32>
    %75 = arith.extui %74 : vector<128x128xi1> to vector<128x128xi32>
    %76 = arith.sitofp %75 : vector<128x128xi32> to vector<128x128xf32>
    %77 = arith.subf %71, %76 : vector<128x128xf32>
    %78 = arith.truncf %77 : vector<128x128xf32> to vector<128x128xbf16>
    %79 = vector.extract_strided_slice %3 {offsets = [6, 0], sizes = [1, 128], strides = [1, 1]} : vector<9x128xi32> to vector<1x128xi32>
    %80 = vector.broadcast %79 : vector<1x128xi32> to vector<128x128xi32>
    %81 = arith.cmpi eq, %6, %80 : vector<128x128xi32>
    %82 = arith.extui %81 : vector<128x128xi1> to vector<128x128xi32>
    %83 = arith.sitofp %82 : vector<128x128xi32> to vector<128x128xf32>
    %84 = vector.extract_strided_slice %5 {offsets = [6, 0], sizes = [1, 128], strides = [1, 1]} : vector<9x128xi32> to vector<1x128xi32>
    %85 = vector.broadcast %84 : vector<1x128xi32> to vector<128x128xi32>
    %86 = arith.cmpi eq, %6, %85 : vector<128x128xi32>
    %87 = arith.extui %86 : vector<128x128xi1> to vector<128x128xi32>
    %88 = arith.sitofp %87 : vector<128x128xi32> to vector<128x128xf32>
    %89 = arith.subf %83, %88 : vector<128x128xf32>
    %90 = arith.truncf %89 : vector<128x128xf32> to vector<128x128xbf16>
    %91 = vector.extract_strided_slice %3 {offsets = [7, 0], sizes = [1, 128], strides = [1, 1]} : vector<9x128xi32> to vector<1x128xi32>
    %92 = vector.broadcast %91 : vector<1x128xi32> to vector<128x128xi32>
    %93 = arith.cmpi eq, %6, %92 : vector<128x128xi32>
    %94 = arith.extui %93 : vector<128x128xi1> to vector<128x128xi32>
    %95 = arith.sitofp %94 : vector<128x128xi32> to vector<128x128xf32>
    %96 = vector.extract_strided_slice %5 {offsets = [7, 0], sizes = [1, 128], strides = [1, 1]} : vector<9x128xi32> to vector<1x128xi32>
    %97 = vector.broadcast %96 : vector<1x128xi32> to vector<128x128xi32>
    %98 = arith.cmpi eq, %6, %97 : vector<128x128xi32>
    %99 = arith.extui %98 : vector<128x128xi1> to vector<128x128xi32>
    %100 = arith.sitofp %99 : vector<128x128xi32> to vector<128x128xf32>
    %101 = arith.subf %95, %100 : vector<128x128xf32>
    %102 = arith.truncf %101 : vector<128x128xf32> to vector<128x128xbf16>
    %103 = vector.extract_strided_slice %3 {offsets = [8, 0], sizes = [1, 128], strides = [1, 1]} : vector<9x128xi32> to vector<1x128xi32>
    %104 = vector.broadcast %103 : vector<1x128xi32> to vector<128x128xi32>
    %105 = arith.cmpi eq, %6, %104 : vector<128x128xi32>
    %106 = arith.extui %105 : vector<128x128xi1> to vector<128x128xi32>
    %107 = arith.sitofp %106 : vector<128x128xi32> to vector<128x128xf32>
    %108 = vector.extract_strided_slice %5 {offsets = [8, 0], sizes = [1, 128], strides = [1, 1]} : vector<9x128xi32> to vector<1x128xi32>
    %109 = vector.broadcast %108 : vector<1x128xi32> to vector<128x128xi32>
    %110 = arith.cmpi eq, %6, %109 : vector<128x128xi32>
    %111 = arith.extui %110 : vector<128x128xi1> to vector<128x128xi32>
    %112 = arith.sitofp %111 : vector<128x128xi32> to vector<128x128xf32>
    %113 = arith.subf %107, %112 : vector<128x128xf32>
    %114 = arith.truncf %113 : vector<128x128xf32> to vector<128x128xbf16>
    %115 = tpu.concatenate %18, %30, %42, %54, %66, %78, %90, %102, %114 in 1 : vector<128x128xbf16>, vector<128x128xbf16>, vector<128x128xbf16>, vector<128x128xbf16>, vector<128x128xbf16>, vector<128x128xbf16>, vector<128x128xbf16>, vector<128x128xbf16>, vector<128x128xbf16> -> vector<128x1152xbf16>
    %cst = arith.constant dense<0.000000e+00> : vector<8x1152xf32>
    %116 = tpu.matmul %1, %115, %cst {dimension_numbers = #tpu.dot_dimension_numbers<[1], [0], [0], [1], [0, 0, 1, 1], [], []>} : vector<8x128xbf16>, vector<128x1152xbf16>, vector<8x1152xf32> -> vector<8x1152xf32>
    %117 = vector.extract_strided_slice %116 {offsets = [0, 0], sizes = [8, 128], strides = [1, 1]} : vector<8x1152xf32> to vector<8x128xf32>
    %118 = vector.extract_strided_slice %116 {offsets = [0, 128], sizes = [8, 128], strides = [1, 1]} : vector<8x1152xf32> to vector<8x128xf32>
    %119 = arith.maximumf %117, %118 : vector<8x128xf32>
    %120 = vector.extract_strided_slice %116 {offsets = [0, 256], sizes = [8, 128], strides = [1, 1]} : vector<8x1152xf32> to vector<8x128xf32>
    %121 = arith.maximumf %119, %120 : vector<8x128xf32>
    %122 = vector.extract_strided_slice %116 {offsets = [0, 384], sizes = [8, 128], strides = [1, 1]} : vector<8x1152xf32> to vector<8x128xf32>
    %123 = arith.maximumf %121, %122 : vector<8x128xf32>
    %124 = vector.extract_strided_slice %116 {offsets = [0, 512], sizes = [8, 128], strides = [1, 1]} : vector<8x1152xf32> to vector<8x128xf32>
    %125 = arith.maximumf %123, %124 : vector<8x128xf32>
    %126 = vector.extract_strided_slice %116 {offsets = [0, 640], sizes = [8, 128], strides = [1, 1]} : vector<8x1152xf32> to vector<8x128xf32>
    %127 = arith.maximumf %125, %126 : vector<8x128xf32>
    %128 = vector.extract_strided_slice %116 {offsets = [0, 768], sizes = [8, 128], strides = [1, 1]} : vector<8x1152xf32> to vector<8x128xf32>
    %129 = arith.maximumf %127, %128 : vector<8x128xf32>
    %130 = vector.extract_strided_slice %116 {offsets = [0, 896], sizes = [8, 128], strides = [1, 1]} : vector<8x1152xf32> to vector<8x128xf32>
    %131 = arith.maximumf %129, %130 : vector<8x128xf32>
    %132 = vector.extract_strided_slice %116 {offsets = [0, 1024], sizes = [8, 128], strides = [1, 1]} : vector<8x1152xf32> to vector<8x128xf32>
    %133 = arith.maximumf %131, %132 : vector<8x128xf32>
    %c128_i32 = arith.constant 128 : i32
    %134 = arith.muli %arg1, %c128_i32 : i32
    %135 = tpu.assume_multiple %134, 128 : i32
    %c0_8 = arith.constant 0 : index
    %c0_9 = arith.constant 0 : index
    %136 = arith.index_cast %135 : i32 to index
    %137 = vector.load %arg2[%c0_8, %c0_9, %136] : memref<1x8x128xbf16, #tpu.memory_space<vmem>>, vector<1x8x128xbf16>
    %138 = vector.shape_cast %137 : vector<1x8x128xbf16> to vector<8x128xbf16>
    %139 = arith.truncf %133 : vector<8x128xf32> to vector<8x128xbf16>
    %140 = tpu.concatenate %138, %139 in 0 : vector<8x128xbf16>, vector<8x128xbf16> -> vector<16x128xbf16>
    %c0_10 = arith.constant 0 : index
    %c0_11 = arith.constant 0 : index
    %141 = vector.load %arg5[%c0_10, %c0_11] : memref<16x16xbf16, #tpu.memory_space<vmem>>, vector<16x16xbf16>
    %cst_12 = arith.constant dense<0.000000e+00> : vector<16x128xf32>
    %142 = tpu.matmul %141, %140, %cst_12 {dimension_numbers = #tpu.dot_dimension_numbers<[1], [0], [0], [1], [0, 0, 1, 1], [], []>} : vector<16x16xbf16>, vector<16x128xbf16>, vector<16x128xf32> -> vector<16x128xf32>
    %c0_13 = arith.constant 0 : index
    %c0_14 = arith.constant 0 : index
    %143 = vector.load %arg6[%c0_13, %c0_14] : memref<16x1xf32, #tpu.memory_space<vmem>>, vector<16x1xf32>
    %144 = vector.broadcast %143 : vector<16x1xf32> to vector<16x128xf32>
    %145 = arith.addf %142, %144 : vector<16x128xf32>
    %cst_15 = arith.constant 5.000000e-01 : f32
    %146 = vector.broadcast %cst_15 : f32 to vector<16x128xf32>
    %147 = arith.mulf %146, %145 : vector<16x128xf32>
    %cst_16 = arith.constant 4.471500e-02 : f32
    %148 = vector.broadcast %cst_16 : f32 to vector<16x128xf32>
    %149 = arith.mulf %148, %145 : vector<16x128xf32>
    %150 = arith.mulf %149, %145 : vector<16x128xf32>
    %151 = arith.mulf %150, %145 : vector<16x128xf32>
    %152 = arith.addf %145, %151 : vector<16x128xf32>
    %cst_17 = arith.constant 0.797884583 : f32
    %153 = vector.broadcast %cst_17 : f32 to vector<16x128xf32>
    %154 = arith.mulf %153, %152 : vector<16x128xf32>
    %155 = math.tanh %154 : vector<16x128xf32>
    %cst_18 = arith.constant 1.000000e+00 : f32
    %156 = vector.broadcast %cst_18 : f32 to vector<16x128xf32>
    %157 = arith.addf %156, %155 : vector<16x128xf32>
    %158 = arith.mulf %147, %157 : vector<16x128xf32>
    %c0_19 = arith.constant 0 : index
    %c0_20 = arith.constant 0 : index
    %c0_21 = arith.constant 0 : index
    %159 = vector.load %arg7[%c0_19, %c0_20, %c0_21] : memref<1x16x128xf32, #tpu.memory_space<vmem>>, vector<1x16x128xf32>
    %160 = vector.shape_cast %159 : vector<1x16x128xf32> to vector<16x128xf32>
    %161 = vector.shape_cast %158 : vector<16x128xf32> to vector<1x16x128xf32>
    tpu.vector_store %arg7[%c0_19, %c0_20, %c0_21], %161 {strides = array<i32>} : memref<1x16x128xf32, #tpu.memory_space<vmem>>, vector<1x16x128xf32>,
    return
  }
  func.func @transform_0(%arg0: i32, %arg1: i32) -> (i32, i32, i32) {
    %c0_i32 = arith.constant 0 : i32
    %c0_i32_0 = arith.constant 0 : i32
    %c0_i32_1 = arith.constant 0 : i32
    return %arg0, %c0_i32, %c0_i32_0 : i32, i32, i32
  }
  func.func @transform_1(%arg0: i32, %arg1: i32) -> (i32, i32, i32) {
    %c0_i32 = arith.constant 0 : i32
    %c0_i32_0 = arith.constant 0 : i32
    return %arg0, %c0_i32, %arg1 : i32, i32, i32
  }
  func.func @transform_2(%arg0: i32, %arg1: i32) -> (i32, i32, i32) {
    %c0_i32 = arith.constant 0 : i32
    %c0_i32_0 = arith.constant 0 : i32
    return %arg0, %c0_i32, %arg1 : i32, i32, i32
  }
  func.func @transform_3(%arg0: i32, %arg1: i32) -> (i32, i32) {
    %c0_i32 = arith.constant 0 : i32
    %c0_i32_0 = arith.constant 0 : i32
    %c0_i32_1 = arith.constant 0 : i32
    return %c0_i32, %c0_i32_0 : i32, i32
  }
  func.func @transform_4(%arg0: i32, %arg1: i32) -> (i32, i32) {
    %c0_i32 = arith.constant 0 : i32
    %c0_i32_0 = arith.constant 0 : i32
    %c0_i32_1 = arith.constant 0 : i32
    return %c0_i32, %c0_i32_0 : i32, i32
  }
  func.func @transform_5(%arg0: i32, %arg1: i32) -> (i32, i32, i32) {
    %c0_i32 = arith.constant 0 : i32
    %c0_i32_0 = arith.constant 0 : i32
    return %arg0, %c0_i32, %arg1 : i32, i32, i32
  }
}

</mosaic_0001>

<llo_original>
// kernel: tpu_custom_call.1
$region0: #{tpu_custom_call.1}
  #allocation0 [shape = 'u32[]', space=smem, size = 0x4, offset = 0x4, fixed_abs, tag = 'smem constant byte address 0x4 - core index']
  #allocation1 [shape = 'u32[144,128]{1,0:T(1,128)}', space=vmem, size = 0x12000, scoped, tag = 'internal scratch']
  %s0 = inlined_call_operand.vmem [shape: bf16[2,8,128], index: 0, kind: input, shape index: {}]
  %s1 = inlined_call_operand.vmem [shape: s32[2,9,128], index: 1, kind: input, shape index: {}]
  %s2 = inlined_call_operand.vmem [shape: s32[2,9,128], index: 2, kind: input, shape index: {}]
  %s3 = inlined_call_operand.vmem [shape: bf16[16,16], index: 3, kind: input, shape index: {}]
  %s4 = inlined_call_operand.vmem [shape: f32[16,1], index: 4, kind: input, shape index: {}]
  %s5 = inlined_call_operand.hbm [shape: f32[2,16,128], index: 5, kind: output, shape index: {}]
  %s6 = sld [smem:[#allocation0]]
  $region53: #{tpu_custom_call.1} parent=0
    _
  %s8 = ssub.s32 1, %s6
  %s9 = scalar_select 0, %s8, %s6
  $region1: #{tpu_custom_call.1} parent=0
    #allocation2 [shape = 'u8[16384]{0}', space=vmem, size = 0x4000, scoped, tag = 'output window, operand 0']
    #allocation3 [shape = 's32[2]{0}', space=sflag, size = 0x8, scoped, tag = 'scoped memory for tpu_custom_call.1']
    %10 = vsyncpa [#allocation3], 0
    %s11 = scalar_lea.sflag [#allocation3], 1
    %12 = vsyncpa %s11, 0
    loop: start=0, step=1, limit=4
    $region2: #{tpu_custom_call.1} parent=1 // loop_pre_header
      _
    $region3: #{tpu_custom_call.1} parent=1 // loop_header
      %s14 = sphi 0, %s18
      %p15 = scmp.ge.s32.totalorder %s14, 4
      %s21 = sphi 0, %s33
      %s22 = sphi 0, %s29
      %s23 = sphi 0, %s21
      %s24 = sphi 0, %s22
      %s25 = sphi 0, %s23
      %s26 = sphi 0, %s24
      %s36 = sphi 0, %s38
      %s39 = sphi 0, %s36
      %s40 = sphi 0, %s39
      %s56 = sphi 0, %s40
      %s64 = sphi 0, %s66
      %s67 = sphi 0, %s64
      %s68 = sphi 0, %s67
      %s84 = sphi 0, %s68
      %s92 = sphi 0, %s94
      %s95 = sphi 0, %s92
      %s96 = sphi 0, %s95
      %s112 = sphi 0, %s96
      %s116 = sphi 0, %s116
      %s118 = sphi 0, %s116
      %s119 = sphi 0, %s118
      %s133 = sphi 0, %s119
      %s137 = sphi 0, %s137
      %s139 = sphi 0, %s137
      %s140 = sphi 0, %s139
      %s154 = sphi 0, %s140
      %s162 = sphi 0, %s164
      %s165 = sphi 0, %s162
      %s166 = sphi 0, %s165
      %s182 = sphi 0, %s166
    $region4: #{tpu_custom_call.1} parent=1 // loop_header_branch
      %17 = sbr.rel (%p15) target = $region8
    $region5: #{tpu_custom_call.1} parent=1 // loop_body
      %s19 = ssub.s32 %s14, 1
      %s20 = ssub.s32 %s14, 2
      %s27 = sadd.s32 1, %s22
      %p28 = scmp.ge.s32.totalorder %s27, 1
      %s29 = scalar_select %p28, 0, %s27
      %s30 = sadd.s32 1, %s21
      %s31 = scalar_select %p28, %s30, %s21
      %p32 = scmp.ge.s32.totalorder %s31, 2
      %s33 = scalar_select %p32, 0, %s31
      %s34 = ssub.s32 %s21, %s33
      %p35 = scmp.eq.s32.totalorder %s34, 0
      %s37 = sadd.s32 %s36, 1
      %s38 = scalar_select %p35, %s36, %s37
      %p41 = pneg %p35
      %p42 = scmp.eq.s32.totalorder %s14, 1
      %p43 = por %p41, %p42
      %p44 = scmp.ne.s32.totalorder %s36, %s39
      %p45 = scmp.eq.s32.totalorder %s14, 0
      %p46 = por %p44, %p45
      %p47 = scmp.ne.s32.totalorder %s36, %s39
      %p48 = scmp.eq.s32.totalorder %s19, 1
      %p49 = por %p47, %p48
      %p50 = scmp.ne.s32.totalorder %s39, %s40
      %p51 = scmp.eq.s32.totalorder %s19, 0
      %p52 = por %p50, %p51
      %p53 = scmp.ne.s32.totalorder %s39, %s40
      %p54 = scmp.eq.s32.totalorder %s20, 1
      %p55 = por %p53, %p54
      %p57 = scmp.ne.s32.totalorder %s40, %s56
      %p58 = scmp.eq.s32.totalorder %s20, 0
      %p59 = por %p57, %p58
      %s60 = ssub.s32 %s21, %s33
      %s61 = ssub.s32 %s22, %s29
      %s62 = sor.u32 %s60, %s61
      %p63 = scmp.eq.s32.totalorder %s62, 0
      %s65 = sadd.s32 %s64, 1
      %s66 = scalar_select %p63, %s64, %s65
      %p69 = pneg %p63
      %p70 = scmp.eq.s32.totalorder %s14, 1
      %p71 = por %p69, %p70
      %p72 = scmp.ne.s32.totalorder %s64, %s67
      %p73 = scmp.eq.s32.totalorder %s14, 0
      %p74 = por %p72, %p73
      %p75 = scmp.ne.s32.totalorder %s64, %s67
      %p76 = scmp.eq.s32.totalorder %s19, 1
      %p77 = por %p75, %p76
      %p78 = scmp.ne.s32.totalorder %s67, %s68
      %p79 = scmp.eq.s32.totalorder %s19, 0
      %p80 = por %p78, %p79
      %p81 = scmp.ne.s32.totalorder %s67, %s68
      %p82 = scmp.eq.s32.totalorder %s20, 1
      %p83 = por %p81, %p82
      %p85 = scmp.ne.s32.totalorder %s68, %s84
      %p86 = scmp.eq.s32.totalorder %s20, 0
      %p87 = por %p85, %p86
      %s88 = ssub.s32 %s21, %s33
      %s89 = ssub.s32 %s22, %s29
      %s90 = sor.u32 %s88, %s89
      %p91 = scmp.eq.s32.totalorder %s90, 0
      %s93 = sadd.s32 %s92, 1
      %s94 = scalar_select %p91, %s92, %s93
      %p97 = pneg %p91
      %p98 = scmp.eq.s32.totalorder %s14, 1
      %p99 = por %p97, %p98
      %p100 = scmp.ne.s32.totalorder %s92, %s95
      %p101 = scmp.eq.s32.totalorder %s14, 0
      %p102 = por %p100, %p101
      %p103 = scmp.ne.s32.totalorder %s92, %s95
      %p104 = scmp.eq.s32.totalorder %s19, 1
      %p105 = por %p103, %p104
      %p106 = scmp.ne.s32.totalorder %s95, %s96
      %p107 = scmp.eq.s32.totalorder %s19, 0
      %p108 = por %p106, %p107
      %p109 = scmp.ne.s32.totalorder %s95, %s96
      %p110 = scmp.eq.s32.totalorder %s20, 1
      %p111 = por %p109, %p110
      %p113 = scmp.ne.s32.totalorder %s96, %s112
      %p114 = scmp.eq.s32.totalorder %s20, 0
      %p115 = por %p113, %p114
      %s117 = sadd.s32 %s116, 1
      %p120 = scmp.eq.s32.totalorder %s14, 1
      %p121 = scmp.ne.s32.totalorder %s116, %s118
      %p122 = scmp.eq.s32.totalorder %s14, 0
      %p123 = por %p121, %p122
      %p124 = scmp.ne.s32.totalorder %s116, %s118
      %p125 = scmp.eq.s32.totalorder %s19, 1
      %p126 = por %p124, %p125
      %p127 = scmp.ne.s32.totalorder %s118, %s119
      %p128 = scmp.eq.s32.totalorder %s19, 0
      %p129 = por %p127, %p128
      %p130 = scmp.ne.s32.totalorder %s118, %s119
      %p131 = scmp.eq.s32.totalorder %s20, 1
      %p132 = por %p130, %p131
      %p134 = scmp.ne.s32.totalorder %s119, %s133
      %p135 = scmp.eq.s32.totalorder %s20, 0
      %p136 = por %p134, %p135
      %s138 = sadd.s32 %s137, 1
      %p141 = scmp.eq.s32.totalorder %s14, 1
      %p142 = scmp.ne.s32.totalorder %s137, %s139
      %p143 = scmp.eq.s32.totalorder %s14, 0
      %p144 = por %p142, %p143
      %p145 = scmp.ne.s32.totalorder %s137, %s139
      %p146 = scmp.eq.s32.totalorder %s19, 1
      %p147 = por %p145, %p146
      %p148 = scmp.ne.s32.totalorder %s139, %s140
      %p149 = scmp.eq.s32.totalorder %s19, 0
      %p150 = por %p148, %p149
      %p151 = scmp.ne.s32.totalorder %s139, %s140
      %p152 = scmp.eq.s32.totalorder %s20, 1
      %p153 = por %p151, %p152
      %p155 = scmp.ne.s32.totalorder %s140, %s154
      %p156 = scmp.eq.s32.totalorder %s20, 0
      %p157 = por %p155, %p156
      %s158 = ssub.s32 %s21, %s33
      %s159 = ssub.s32 %s22, %s29
      %s160 = sor.u32 %s158, %s159
      %p161 = scmp.eq.s32.totalorder %s160, 0
      %s163 = sadd.s32 %s162, 1
      %s164 = scalar_select %p161, %s162, %s163
      %p167 = pneg %p161
      %p168 = scmp.eq.s32.totalorder %s14, 1
      %p169 = por %p167, %p168
      %p170 = scmp.ne.s32.totalorder %s162, %s165
      %p171 = scmp.eq.s32.totalorder %s14, 0
      %p172 = por %p170, %p171
      %p173 = scmp.ne.s32.totalorder %s162, %s165
      %p174 = scmp.eq.s32.totalorder %s19, 1
      %p175 = por %p173, %p174
      %p176 = scmp.ne.s32.totalorder %s165, %s166
      %p177 = scmp.eq.s32.totalorder %s19, 0
      %p178 = por %p176, %p177
      %p179 = scmp.ne.s32.totalorder %s165, %s166
      %p180 = scmp.eq.s32.totalorder %s20, 1
      %p181 = por %p179, %p180
      %p183 = scmp.ne.s32.totalorder %s166, %s182
      %p184 = scmp.eq.s32.totalorder %s20, 0
      %p185 = por %p183, %p184
      %p186 = scmp.le.s32.totalorder 1, %s14
      %p187 = scmp.lt.s32.totalorder %s14, 3
      %p188 = pnand %p186, %p187
      %p189 = pneg %p188
      // Predicated region
      $region9: #{tpu_custom_call.1} parent=5 // pred_check
        _
      $region10: #{tpu_custom_call.1} parent=5 // pred_check_branch
        %191 = sbr.rel (%p188) target = $region12
      $region11: #{tpu_custom_call.1} parent=5 // pred_region
        %s192 = ssub.s32 %s14, 1
        // Predicated region
        $region13: #{tpu_custom_call.1} parent=11 // pred_check
          %p193 = pneg %p129
        $region14: #{tpu_custom_call.1} parent=11 // pred_check_branch
          %195 = sbr.rel (%p193) target = $region16
        $region15: #{tpu_custom_call.1} parent=11 // pred_region
          _
        $region16: #{tpu_custom_call.1} parent=11 // pred_fallthru
          _
        // Predicated region
        $region17: #{tpu_custom_call.1} parent=11 // pred_check
          %p196 = pneg %p150
        $region18: #{tpu_custom_call.1} parent=11 // pred_check_branch
          %198 = sbr.rel (%p196) target = $region20
        $region19: #{tpu_custom_call.1} parent=11 // pred_region
          _
        $region20: #{tpu_custom_call.1} parent=11 // pred_fallthru
          _
      $region12: #{tpu_custom_call.1} parent=5 // pred_fallthru
        _
      %p199 = scmp.lt.s32.totalorder %s14, 2
      // Predicated region
      $region21: #{tpu_custom_call.1} parent=5 // pred_check
        %p200 = pneg %p199
      $region22: #{tpu_custom_call.1} parent=5 // pred_check_branch
        %202 = sbr.rel (%p200) target = $region24
      $region23: #{tpu_custom_call.1} parent=5 // pred_region
        // Predicated region
        $region25: #{tpu_custom_call.1} parent=23 // pred_check
          %p203 = pneg %p46
        $region26: #{tpu_custom_call.1} parent=23 // pred_check_branch
          %205 = sbr.rel (%p203) target = $region28
        $region27: #{tpu_custom_call.1} parent=23 // pred_region
          %p206 = scmp.lt.s32.totalorder %s21, 1
          %s207 = scalar_select %p206, %s21, 1
          %s208 = smul.addr %s207, 4
          %s209 = scalar_lea.vmem %s0, %s208
        $region28: #{tpu_custom_call.1} parent=23 // pred_fallthru
          _
        // Predicated region
        $region29: #{tpu_custom_call.1} parent=23 // pred_check
          %p210 = pneg %p74
        $region30: #{tpu_custom_call.1} parent=23 // pred_check_branch
          %212 = sbr.rel (%p210) target = $region32
        $region31: #{tpu_custom_call.1} parent=23 // pred_region
          %p213 = scmp.lt.s32.totalorder %s21, 1
          %s214 = scalar_select %p213, %s21, 1
          %p215 = scmp.lt.s32.totalorder %s22, 0
          %s216 = scalar_select %p215, %s22, 0
          %s217 = smul.addr %s214, 2
          %s218 = sadd.s32 %s216, %s217
          %s219 = smul.addr %s218, 8
          %s220 = scalar_lea.vmem %s1, %s219
        $region32: #{tpu_custom_call.1} parent=23 // pred_fallthru
          _
        // Predicated region
        $region33: #{tpu_custom_call.1} parent=23 // pred_check
          %p221 = pneg %p102
        $region34: #{tpu_custom_call.1} parent=23 // pred_check_branch
          %223 = sbr.rel (%p221) target = $region36
        $region35: #{tpu_custom_call.1} parent=23 // pred_region
          %p224 = scmp.lt.s32.totalorder %s21, 1
          %s225 = scalar_select %p224, %s21, 1
          %p226 = scmp.lt.s32.totalorder %s22, 0
          %s227 = scalar_select %p226, %s22, 0
          %s228 = smul.addr %s225, 2
          %s229 = sadd.s32 %s227, %s228
          %s230 = smul.addr %s229, 8
          %s231 = scalar_lea.vmem %s2, %s230
        $region36: #{tpu_custom_call.1} parent=23 // pred_fallthru
          _
      $region24: #{tpu_custom_call.1} parent=5 // pred_fallthru
        _
      %p232 = scmp.le.s32.totalorder 1, %s14
      %p233 = scmp.lt.s32.totalorder %s14, 3
      %p234 = pnand %p232, %p233
      %p235 = pneg %p234
      // Predicated region
      $region37: #{tpu_custom_call.1} parent=5 // pred_check
        _
      $region38: #{tpu_custom_call.1} parent=5 // pred_check_branch
        %237 = sbr.rel (%p234) target = $region40
      $region39: #{tpu_custom_call.1} parent=5 // pred_region
        %s238 = ssub.s32 %s14, 1
        %p239 = scmp.lt.s32.totalorder %s23, 1
        %s240 = scalar_select %p239, %s23, 1
        %s241 = smul.addr %s240, 4
        %s242 = scalar_lea.vmem %s0, %s241
        %p243 = pneg %p52
        %p244 = pneg %p49
        %p245 = scmp.lt.s32.totalorder %s23, 1
        %s246 = scalar_select %p245, %s23, 1
        %p247 = scmp.lt.s32.totalorder %s24, 0
        %s248 = scalar_select %p247, %s24, 0
        %s249 = smul.addr %s246, 2
        %s250 = sadd.s32 %s248, %s249
        %s251 = smul.addr %s250, 8
        %s252 = scalar_lea.vmem %s1, %s251
        %p253 = pneg %p80
        %p254 = pneg %p77
        %p255 = scmp.lt.s32.totalorder %s23, 1
        %s256 = scalar_select %p255, %s23, 1
        %p257 = scmp.lt.s32.totalorder %s24, 0
        %s258 = scalar_select %p257, %s24, 0
        %s259 = smul.addr %s256, 2
        %s260 = sadd.s32 %s258, %s259
        %s261 = smul.addr %s260, 8
        %s262 = scalar_lea.vmem %s2, %s261
        %p263 = pneg %p108
        %p264 = pneg %p105
        %p265 = pneg %p129
        %p266 = pneg %p126
        %p267 = pneg %p150
        %p268 = pneg %p147
        %p269 = pneg %p178
        %p270 = pneg %p175
        %s271 = sand.u32 %s165, 1
        %s272 = scalar_lea.sflag [#allocation3], %s271
        %s273 = sand.u32 %s165, 1
        %s274 = smul.addr %s273, 16
        %s275 = scalar_lea.vmem [#allocation2], %s274
        %p276 = scmp.lt.s32.totalorder %s23, 1
        %s277 = scalar_select %p276, %s23, 1
        %s278 = smul.addr %s277, 4
        %s279 = scalar_lea.vmem %s0, %s278
        %p280 = scmp.lt.s32.totalorder %s23, 1
        %s281 = scalar_select %p280, %s23, 1
        %p282 = scmp.lt.s32.totalorder %s24, 0
        %s283 = scalar_select %p282, %s24, 0
        %s284 = smul.addr %s281, 2
        %s285 = sadd.s32 %s283, %s284
        %s286 = smul.addr %s285, 8
        %s287 = scalar_lea.vmem %s1, %s286
        %p288 = scmp.lt.s32.totalorder %s23, 1
        %s289 = scalar_select %p288, %s23, 1
        %p290 = scmp.lt.s32.totalorder %s24, 0
        %s291 = scalar_select %p290, %s24, 0
        %s292 = smul.addr %s289, 2
        %s293 = sadd.s32 %s291, %s292
        %s294 = smul.addr %s293, 8
        %s295 = scalar_lea.vmem %s2, %s294
        %v297 = vld [vmem:[%s279] sm:$0xf]
        %v298 = vld [vmem:[%s287] sm:$0xff]
        %v299 = vld [vmem:[%s287 + $0x8] sm:$0x1]
        %v300 = vld [vmem:[%s295] sm:$0xff]
        %v301 = vld [vmem:[%s295 + $0x8] sm:$0x1]
        %v302 = vlaneseq
        %v303 = vshrl.u32 %v302, 7
        %v304 = vadd.s32 %v303, 8
        %v305 = vadd.s32 %v303, 16
        %v306 = vadd.s32 %v303, 24
        %v307 = vadd.s32 %v303, 32
        %v308 = vadd.s32 %v303, 40
        %v309 = vadd.s32 %v303, 48
        %v310 = vadd.s32 %v303, 56
        %v311 = vadd.s32 %v303, 64
        %v312 = vadd.s32 %v303, 72
        %v313 = vadd.s32 %v303, 80
        %v314 = vadd.s32 %v303, 88
        %v315 = vadd.s32 %v303, 96
        %v316 = vadd.s32 %v303, 104
        %v317 = vadd.s32 %v303, 112
        %v318 = vadd.s32 %v303, 120
        %v319 = vlaneseq
        %v320 = vshrl.u32 %v319, 7
        %v321 = vsub.s32 0, %v320
        %v322 = vrot.slane %v298, %v321
        %vm323 = vcmp.eq.s32.totalorder %v303, %v322
        %vm324 = vcmp.eq.s32.totalorder %v304, %v322
        %vm325 = vcmp.eq.s32.totalorder %v305, %v322
        %vm326 = vcmp.eq.s32.totalorder %v306, %v322
        %vm327 = vcmp.eq.s32.totalorder %v307, %v322
        %vm328 = vcmp.eq.s32.totalorder %v308, %v322
        %vm329 = vcmp.eq.s32.totalorder %v309, %v322
        %vm330 = vcmp.eq.s32.totalorder %v310, %v322
        %vm331 = vcmp.eq.s32.totalorder %v311, %v322
        %vm332 = vcmp.eq.s32.totalorder %v312, %v322
        %vm333 = vcmp.eq.s32.totalorder %v313, %v322
        %vm334 = vcmp.eq.s32.totalorder %v314, %v322
        %vm335 = vcmp.eq.s32.totalorder %v315, %v322
        %vm336 = vcmp.eq.s32.totalorder %v316, %v322
        %vm337 = vcmp.eq.s32.totalorder %v317, %v322
        %vm338 = vcmp.eq.s32.totalorder %v318, %v322
        %v339 = vsel %vm323, 1, 0
        %v340 = vsel %vm324, 1, 0
        %v341 = vsel %vm325, 1, 0
        %v342 = vsel %vm326, 1, 0
        %v343 = vsel %vm327, 1, 0
        %v344 = vsel %vm328, 1, 0
        %v345 = vsel %vm329, 1, 0
        %v346 = vsel %vm330, 1, 0
        %v347 = vsel %vm331, 1, 0
        %v348 = vsel %vm332, 1, 0
        %v349 = vsel %vm333, 1, 0
        %v350 = vsel %vm334, 1, 0
        %v351 = vsel %vm335, 1, 0
        %v352 = vsel %vm336, 1, 0
        %v353 = vsel %vm337, 1, 0
        %v354 = vsel %vm338, 1, 0
        %v355 = vcvt.s32.f32 %v339
        %v356 = vcvt.s32.f32 %v340
        %v357 = vcvt.s32.f32 %v341
        %v358 = vcvt.s32.f32 %v342
        %v359 = vcvt.s32.f32 %v343
        %v360 = vcvt.s32.f32 %v344
        %v361 = vcvt.s32.f32 %v345
        %v362 = vcvt.s32.f32 %v346
        %v363 = vcvt.s32.f32 %v347
        %v364 = vcvt.s32.f32 %v348
        %v365 = vcvt.s32.f32 %v349
        %v366 = vcvt.s32.f32 %v350
        %v367 = vcvt.s32.f32 %v351
        %v368 = vcvt.s32.f32 %v352
        %v369 = vcvt.s32.f32 %v353
        %v370 = vcvt.s32.f32 %v354
        %v371 = vlaneseq
        %v372 = vshrl.u32 %v371, 7
        %v373 = vsub.s32 0, %v372
        %v374 = vrot.slane %v300, %v373
        %vm375 = vcmp.eq.s32.totalorder %v303, %v374
        %vm376 = vcmp.eq.s32.totalorder %v304, %v374
        %vm377 = vcmp.eq.s32.totalorder %v305, %v374
        %vm378 = vcmp.eq.s32.totalorder %v306, %v374
        %vm379 = vcmp.eq.s32.totalorder %v307, %v374
        %vm380 = vcmp.eq.s32.totalorder %v308, %v374
        %vm381 = vcmp.eq.s32.totalorder %v309, %v374
        %vm382 = vcmp.eq.s32.totalorder %v310, %v374
        %vm383 = vcmp.eq.s32.totalorder %v311, %v374
        %vm384 = vcmp.eq.s32.totalorder %v312, %v374
        %vm385 = vcmp.eq.s32.totalorder %v313, %v374
        %vm386 = vcmp.eq.s32.totalorder %v314, %v374
        %vm387 = vcmp.eq.s32.totalorder %v315, %v374
        %vm388 = vcmp.eq.s32.totalorder %v316, %v374
        %vm389 = vcmp.eq.s32.totalorder %v317, %v374
        %vm390 = vcmp.eq.s32.totalorder %v318, %v374
        %v391 = vsel %vm375, 1, 0
        %v392 = vsel %vm376, 1, 0
        %v393 = vsel %vm377, 1, 0
        %v394 = vsel %vm378, 1, 0
        %v395 = vsel %vm379, 1, 0
        %v396 = vsel %vm380, 1, 0
        %v397 = vsel %vm381, 1, 0
        %v398 = vsel %vm382, 1, 0
        %v399 = vsel %vm383, 1, 0
        %v400 = vsel %vm384, 1, 0
        %v401 = vsel %vm385, 1, 0
        %v402 = vsel %vm386, 1, 0
        %v403 = vsel %vm387, 1, 0
        %v404 = vsel %vm388, 1, 0
        %v405 = vsel %vm389, 1, 0
        %v406 = vsel %vm390, 1, 0
        %v407 = vcvt.s32.f32 %v391
        %v408 = vcvt.s32.f32 %v392
        %v409 = vcvt.s32.f32 %v393
        %v410 = vcvt.s32.f32 %v394
        %v411 = vcvt.s32.f32 %v395
        %v412 = vcvt.s32.f32 %v396
        %v413 = vcvt.s32.f32 %v397
        %v414 = vcvt.s32.f32 %v398
        %v415 = vcvt.s32.f32 %v399
        %v416 = vcvt.s32.f32 %v400
        %v417 = vcvt.s32.f32 %v401
        %v418 = vcvt.s32.f32 %v402
        %v419 = vcvt.s32.f32 %v403
        %v420 = vcvt.s32.f32 %v404
        %v421 = vcvt.s32.f32 %v405
        %v422 = vcvt.s32.f32 %v406
        %v423 = vsub.f32 %v355, %v407
        %v424 = vsub.f32 %v356, %v408
        %v425 = vsub.f32 %v357, %v409
        %v426 = vsub.f32 %v358, %v410
        %v427 = vsub.f32 %v359, %v411
        %v428 = vsub.f32 %v360, %v412
        %v429 = vsub.f32 %v361, %v413
        %v430 = vsub.f32 %v362, %v414
        %v431 = vsub.f32 %v363, %v415
        %v432 = vsub.f32 %v364, %v416
        %v433 = vsub.f32 %v365, %v417
        %v434 = vsub.f32 %v366, %v418
        %v435 = vsub.f32 %v367, %v419
        %v436 = vsub.f32 %v368, %v420
        %v437 = vsub.f32 %v369, %v421
        %v438 = vsub.f32 %v370, %v422
        %v439 = vpack.c.bf16 %v424, %v423
        %v440 = vpack.c.bf16 %v426, %v425
        %v441 = vpack.c.bf16 %v428, %v427
        %v442 = vpack.c.bf16 %v430, %v429
        %v443 = vpack.c.bf16 %v432, %v431
        %v444 = vpack.c.bf16 %v434, %v433
        %v445 = vpack.c.bf16 %v436, %v435
        %v446 = vpack.c.bf16 %v438, %v437
        %v447 = vlaneseq
        %v448 = vshrl.u32 %v447, 7
        %v449 = vsub.s32 1, %v448
        %v450 = vrot.slane %v298, %v449
        %vm451 = vcmp.eq.s32.totalorder %v303, %v450
        %vm452 = vcmp.eq.s32.totalorder %v304, %v450
        %vm453 = vcmp.eq.s32.totalorder %v305, %v450
        %vm454 = vcmp.eq.s32.totalorder %v306, %v450
        %vm455 = vcmp.eq.s32.totalorder %v307, %v450
        %vm456 = vcmp.eq.s32.totalorder %v308, %v450
        %vm457 = vcmp.eq.s32.totalorder %v309, %v450
        %vm458 = vcmp.eq.s32.totalorder %v310, %v450
        %vm459 = vcmp.eq.s32.totalorder %v311, %v450
        %vm460 = vcmp.eq.s32.totalorder %v312, %v450
        %vm461 = vcmp.eq.s32.totalorder %v313, %v450
        %vm462 = vcmp.eq.s32.totalorder %v314, %v450
        %vm463 = vcmp.eq.s32.totalorder %v315, %v450
        %vm464 = vcmp.eq.s32.totalorder %v316, %v450
        %vm465 = vcmp.eq.s32.totalorder %v317, %v450
        %vm466 = vcmp.eq.s32.totalorder %v318, %v450
        %v467 = vsel %vm451, 1, 0
        %v468 = vsel %vm452, 1, 0
        %v469 = vsel %vm453, 1, 0
        %v470 = vsel %vm454, 1, 0
        %v471 = vsel %vm455, 1, 0
        %v472 = vsel %vm456, 1, 0
        %v473 = vsel %vm457, 1, 0
        %v474 = vsel %vm458, 1, 0
        %v475 = vsel %vm459, 1, 0
        %v476 = vsel %vm460, 1, 0
        %v477 = vsel %vm461, 1, 0
        %v478 = vsel %vm462, 1, 0
        %v479 = vsel %vm463, 1, 0
        %v480 = vsel %vm464, 1, 0
        %v481 = vsel %vm465, 1, 0
        %v482 = vsel %vm466, 1, 0
        %v483 = vcvt.s32.f32 %v467
        %v484 = vcvt.s32.f32 %v468
        %v485 = vcvt.s32.f32 %v469
        %v486 = vcvt.s32.f32 %v470
        %v487 = vcvt.s32.f32 %v471
        %v488 = vcvt.s32.f32 %v472
        %v489 = vcvt.s32.f32 %v473
        %v490 = vcvt.s32.f32 %v474
        %v491 = vcvt.s32.f32 %v475
        %v492 = vcvt.s32.f32 %v476
        %v493 = vcvt.s32.f32 %v477
        %v494 = vcvt.s32.f32 %v478
        %v495 = vcvt.s32.f32 %v479
        %v496 = vcvt.s32.f32 %v480
        %v497 = vcvt.s32.f32 %v481
        %v498 = vcvt.s32.f32 %v482
        %v499 = vlaneseq
        %v500 = vshrl.u32 %v499, 7
        %v501 = vsub.s32 1, %v500
        %v502 = vrot.slane %v300, %v501
        %vm503 = vcmp.eq.s32.totalorder %v303, %v502
        %vm504 = vcmp.eq.s32.totalorder %v304, %v502
        %vm505 = vcmp.eq.s32.totalorder %v305, %v502
        %vm506 = vcmp.eq.s32.totalorder %v306, %v502
        %vm507 = vcmp.eq.s32.totalorder %v307, %v502
        %vm508 = vcmp.eq.s32.totalorder %v308, %v502
        %vm509 = vcmp.eq.s32.totalorder %v309, %v502
        %vm510 = vcmp.eq.s32.totalorder %v310, %v502
        %vm511 = vcmp.eq.s32.totalorder %v311, %v502
        %vm512 = vcmp.eq.s32.totalorder %v312, %v502
        %vm513 = vcmp.eq.s32.totalorder %v313, %v502
        %vm514 = vcmp.eq.s32.totalorder %v314, %v502
        %vm515 = vcmp.eq.s32.totalorder %v315, %v502
        %vm516 = vcmp.eq.s32.totalorder %v316, %v502
        %vm517 = vcmp.eq.s32.totalorder %v317, %v502
        %vm518 = vcmp.eq.s32.totalorder %v318, %v502
        %v519 = vsel %vm503, 1, 0
        %v520 = vsel %vm504, 1, 0
        %v521 = vsel %vm505, 1, 0
        %v522 = vsel %vm506, 1, 0
        %v523 = vsel %vm507, 1, 0
        %v524 = vsel %vm508, 1, 0
        %v525 = vsel %vm509, 1, 0
        %v526 = vsel %vm510, 1, 0
        %v527 = vsel %vm511, 1, 0
        %v528 = vsel %vm512, 1, 0
        %v529 = vsel %vm513, 1, 0
        %v530 = vsel %vm514, 1, 0
        %v531 = vsel %vm515, 1, 0
        %v532 = vsel %vm516, 1, 0
        %v533 = vsel %vm517, 1, 0
        %v534 = vsel %vm518, 1, 0
        %v535 = vcvt.s32.f32 %v519
        %v536 = vcvt.s32.f32 %v520
        %v537 = vcvt.s32.f32 %v521
        %v538 = vcvt.s32.f32 %v522
        %v539 = vcvt.s32.f32 %v523
        %v540 = vcvt.s32.f32 %v524
        %v541 = vcvt.s32.f32 %v525
        %v542 = vcvt.s32.f32 %v526
        %v543 = vcvt.s32.f32 %v527
        %v544 = vcvt.s32.f32 %v528
        %v545 = vcvt.s32.f32 %v529
        %v546 = vcvt.s32.f32 %v530
        %v547 = vcvt.s32.f32 %v531
        %v548 = vcvt.s32.f32 %v532
        %v549 = vcvt.s32.f32 %v533
        %v550 = vcvt.s32.f32 %v534
        %v551 = vsub.f32 %v483, %v535
        %v552 = vsub.f32 %v484, %v536
        %v553 = vsub.f32 %v485, %v537
        %v554 = vsub.f32 %v486, %v538
        %v555 = vsub.f32 %v487, %v539
        %v556 = vsub.f32 %v488, %v540
        %v557 = vsub.f32 %v489, %v541
        %v558 = vsub.f32 %v490, %v542
        %v559 = vsub.f32 %v491, %v543
        %v560 = vsub.f32 %v492, %v544
        %v561 = vsub.f32 %v493, %v545
        %v562 = vsub.f32 %v494, %v546
        %v563 = vsub.f32 %v495, %v547
        %v564 = vsub.f32 %v496, %v548
        %v565 = vsub.f32 %v497, %v549
        %v566 = vsub.f32 %v498, %v550
        %v567 = vpack.c.bf16 %v552, %v551
        %v568 = vpack.c.bf16 %v554, %v553
        %v569 = vpack.c.bf16 %v556, %v555
        %v570 = vpack.c.bf16 %v558, %v557
        %v571 = vpack.c.bf16 %v560, %v559
        %v572 = vpack.c.bf16 %v562, %v561
        %v573 = vpack.c.bf16 %v564, %v563
        %v574 = vpack.c.bf16 %v566, %v565
        %v575 = vlaneseq
        %v576 = vshrl.u32 %v575, 7
        %v577 = vsub.s32 2, %v576
        %v578 = vrot.slane %v298, %v577
        %vm579 = vcmp.eq.s32.totalorder %v303, %v578
        %vm580 = vcmp.eq.s32.totalorder %v304, %v578
        %vm581 = vcmp.eq.s32.totalorder %v305, %v578
        %vm582 = vcmp.eq.s32.totalorder %v306, %v578
        %vm583 = vcmp.eq.s32.totalorder %v307, %v578
        %vm584 = vcmp.eq.s32.totalorder %v308, %v578
        %vm585 = vcmp.eq.s32.totalorder %v309, %v578
        %vm586 = vcmp.eq.s32.totalorder %v310, %v578
        %vm587 = vcmp.eq.s32.totalorder %v311, %v578
        %vm588 = vcmp.eq.s32.totalorder %v312, %v578
        %vm589 = vcmp.eq.s32.totalorder %v313, %v578
        %vm590 = vcmp.eq.s32.totalorder %v314, %v578
        %vm591 = vcmp.eq.s32.totalorder %v315, %v578
        %vm592 = vcmp.eq.s32.totalorder %v316, %v578
        %vm593 = vcmp.eq.s32.totalorder %v317, %v578
        %vm594 = vcmp.eq.s32.totalorder %v318, %v578
        %v595 = vsel %vm579, 1, 0
        %v596 = vsel %vm580, 1, 0
        %v597 = vsel %vm581, 1, 0
        %v598 = vsel %vm582, 1, 0
        %v599 = vsel %vm583, 1, 0
        %v600 = vsel %vm584, 1, 0
        %v601 = vsel %vm585, 1, 0
        %v602 = vsel %vm586, 1, 0
        %v603 = vsel %vm587, 1, 0
        %v604 = vsel %vm588, 1, 0
        %v605 = vsel %vm589, 1, 0
        %v606 = vsel %vm590, 1, 0
        %v607 = vsel %vm591, 1, 0
        %v608 = vsel %vm592, 1, 0
        %v609 = vsel %vm593, 1, 0
        %v610 = vsel %vm594, 1, 0
        %v611 = vcvt.s32.f32 %v595
        %v612 = vcvt.s32.f32 %v596
        %v613 = vcvt.s32.f32 %v597
        %v614 = vcvt.s32.f32 %v598
        %v615 = vcvt.s32.f32 %v599
        %v616 = vcvt.s32.f32 %v600
        %v617 = vcvt.s32.f32 %v601
        %v618 = vcvt.s32.f32 %v602
        %v619 = vcvt.s32.f32 %v603
        %v620 = vcvt.s32.f32 %v604
        %v621 = vcvt.s32.f32 %v605
        %v622 = vcvt.s32.f32 %v606
        %v623 = vcvt.s32.f32 %v607
        %v624 = vcvt.s32.f32 %v608
        %v625 = vcvt.s32.f32 %v609
        %v626 = vcvt.s32.f32 %v610
        %v627 = vlaneseq
        %v628 = vshrl.u32 %v627, 7
        %v629 = vsub.s32 2, %v628
        %v630 = vrot.slane %v300, %v629
        %vm631 = vcmp.eq.s32.totalorder %v303, %v630
        %vm632 = vcmp.eq.s32.totalorder %v304, %v630
        %vm633 = vcmp.eq.s32.totalorder %v305, %v630
        %vm634 = vcmp.eq.s32.totalorder %v306, %v630
        %vm635 = vcmp.eq.s32.totalorder %v307, %v630
        %vm636 = vcmp.eq.s32.totalorder %v308, %v630
        %vm637 = vcmp.eq.s32.totalorder %v309, %v630
        %vm638 = vcmp.eq.s32.totalorder %v310, %v630
        %vm639 = vcmp.eq.s32.totalorder %v311, %v630
        %vm640 = vcmp.eq.s32.totalorder %v312, %v630
        %vm641 = vcmp.eq.s32.totalorder %v313, %v630
        %vm642 = vcmp.eq.s32.totalorder %v314, %v630
        %vm643 = vcmp.eq.s32.totalorder %v315, %v630
        %vm644 = vcmp.eq.s32.totalorder %v316, %v630
        %vm645 = vcmp.eq.s32.totalorder %v317, %v630
        %vm646 = vcmp.eq.s32.totalorder %v318, %v630
        %v647 = vsel %vm631, 1, 0
        %v648 = vsel %vm632, 1, 0
        %v649 = vsel %vm633, 1, 0
        %v650 = vsel %vm634, 1, 0
        %v651 = vsel %vm635, 1, 0
        %v652 = vsel %vm636, 1, 0
        %v653 = vsel %vm637, 1, 0
        %v654 = vsel %vm638, 1, 0
        %v655 = vsel %vm639, 1, 0
        %v656 = vsel %vm640, 1, 0
        %v657 = vsel %vm641, 1, 0
        %v658 = vsel %vm642, 1, 0
        %v659 = vsel %vm643, 1, 0
        %v660 = vsel %vm644, 1, 0
        %v661 = vsel %vm645, 1, 0
        %v662 = vsel %vm646, 1, 0
        %v663 = vcvt.s32.f32 %v647
        %v664 = vcvt.s32.f32 %v648
        %v665 = vcvt.s32.f32 %v649
        %v666 = vcvt.s32.f32 %v650
        %v667 = vcvt.s32.f32 %v651
        %v668 = vcvt.s32.f32 %v652
        %v669 = vcvt.s32.f32 %v653
        %v670 = vcvt.s32.f32 %v654
        %v671 = vcvt.s32.f32 %v655
        %v672 = vcvt.s32.f32 %v656
        %v673 = vcvt.s32.f32 %v657
        %v674 = vcvt.s32.f32 %v658
        %v675 = vcvt.s32.f32 %v659
        %v676 = vcvt.s32.f32 %v660
        %v677 = vcvt.s32.f32 %v661
        %v678 = vcvt.s32.f32 %v662
        %v679 = vsub.f32 %v611, %v663
        %v680 = vsub.f32 %v612, %v664
        %v681 = vsub.f32 %v613, %v665
        %v682 = vsub.f32 %v614, %v666
        %v683 = vsub.f32 %v615, %v667
        %v684 = vsub.f32 %v616, %v668
        %v685 = vsub.f32 %v617, %v669
        %v686 = vsub.f32 %v618, %v670
        %v687 = vsub.f32 %v619, %v671
        %v688 = vsub.f32 %v620, %v672
        %v689 = vsub.f32 %v621, %v673
        %v690 = vsub.f32 %v622, %v674
        %v691 = vsub.f32 %v623, %v675
        %v692 = vsub.f32 %v624, %v676
        %v693 = vsub.f32 %v625, %v677
        %v694 = vsub.f32 %v626, %v678
        %v695 = vpack.c.bf16 %v680, %v679
        %v696 = vpack.c.bf16 %v682, %v681
        %v697 = vpack.c.bf16 %v684, %v683
        %v698 = vpack.c.bf16 %v686, %v685
        %v699 = vpack.c.bf16 %v688, %v687
        %v700 = vpack.c.bf16 %v690, %v689
        %v701 = vpack.c.bf16 %v692, %v691
        %v702 = vpack.c.bf16 %v694, %v693
        %v703 = vlaneseq
        %v704 = vshrl.u32 %v703, 7
        %v705 = vsub.s32 3, %v704
        %v706 = vrot.slane %v298, %v705
        %vm707 = vcmp.eq.s32.totalorder %v303, %v706
        %vm708 = vcmp.eq.s32.totalorder %v304, %v706
        %vm709 = vcmp.eq.s32.totalorder %v305, %v706
        %vm710 = vcmp.eq.s32.totalorder %v306, %v706
        %vm711 = vcmp.eq.s32.totalorder %v307, %v706
        %vm712 = vcmp.eq.s32.totalorder %v308, %v706
        %vm713 = vcmp.eq.s32.totalorder %v309, %v706
        %vm714 = vcmp.eq.s32.totalorder %v310, %v706
        %vm715 = vcmp.eq.s32.totalorder %v311, %v706
        %vm716 = vcmp.eq.s32.totalorder %v312, %v706
        %vm717 = vcmp.eq.s32.totalorder %v313, %v706
        %vm718 = vcmp.eq.s32.totalorder %v314, %v706
        %vm719 = vcmp.eq.s32.totalorder %v315, %v706
        %vm720 = vcmp.eq.s32.totalorder %v316, %v706
        %vm721 = vcmp.eq.s32.totalorder %v317, %v706
        %vm722 = vcmp.eq.s32.totalorder %v318, %v706
        %v723 = vsel %vm707, 1, 0
        %v724 = vsel %vm708, 1, 0
        %v725 = vsel %vm709, 1, 0
        %v726 = vsel %vm710, 1, 0
        %v727 = vsel %vm711, 1, 0
        %v728 = vsel %vm712, 1, 0
        %v729 = vsel %vm713, 1, 0
        %v730 = vsel %vm714, 1, 0
        %v731 = vsel %vm715, 1, 0
        %v732 = vsel %vm716, 1, 0
        %v733 = vsel %vm717, 1, 0
        %v734 = vsel %vm718, 1, 0
        %v735 = vsel %vm719, 1, 0
        %v736 = vsel %vm720, 1, 0
        %v737 = vsel %vm721, 1, 0
        %v738 = vsel %vm722, 1, 0
        %v739 = vcvt.s32.f32 %v723
        %v740 = vcvt.s32.f32 %v724
        %v741 = vcvt.s32.f32 %v725
        %v742 = vcvt.s32.f32 %v726
        %v743 = vcvt.s32.f32 %v727
        %v744 = vcvt.s32.f32 %v728
        %v745 = vcvt.s32.f32 %v729
        %v746 = vcvt.s32.f32 %v730
        %v747 = vcvt.s32.f32 %v731
        %v748 = vcvt.s32.f32 %v732
        %v749 = vcvt.s32.f32 %v733
        %v750 = vcvt.s32.f32 %v734
        %v751 = vcvt.s32.f32 %v735
        %v752 = vcvt.s32.f32 %v736
        %v753 = vcvt.s32.f32 %v737
        %v754 = vcvt.s32.f32 %v738
        %v755 = vlaneseq
        %v756 = vshrl.u32 %v755, 7
        %v757 = vsub.s32 3, %v756
        %v758 = vrot.slane %v300, %v757
        %vm759 = vcmp.eq.s32.totalorder %v303, %v758
        %vm760 = vcmp.eq.s32.totalorder %v304, %v758
        %vm761 = vcmp.eq.s32.totalorder %v305, %v758
        %vm762 = vcmp.eq.s32.totalorder %v306, %v758
        %vm763 = vcmp.eq.s32.totalorder %v307, %v758
        %vm764 = vcmp.eq.s32.totalorder %v308, %v758
        %vm765 = vcmp.eq.s32.totalorder %v309, %v758
        %vm766 = vcmp.eq.s32.totalorder %v310, %v758
        %vm767 = vcmp.eq.s32.totalorder %v311, %v758
        %vm768 = vcmp.eq.s32.totalorder %v312, %v758
        %vm769 = vcmp.eq.s32.totalorder %v313, %v758
        %vm770 = vcmp.eq.s32.totalorder %v314, %v758
        %vm771 = vcmp.eq.s32.totalorder %v315, %v758
        %vm772 = vcmp.eq.s32.totalorder %v316, %v758
        %vm773 = vcmp.eq.s32.totalorder %v317, %v758
        %vm774 = vcmp.eq.s32.totalorder %v318, %v758
        %v775 = vsel %vm759, 1, 0
        %v776 = vsel %vm760, 1, 0
        %v777 = vsel %vm761, 1, 0
        %v778 = vsel %vm762, 1, 0
        %v779 = vsel %vm763, 1, 0
        %v780 = vsel %vm764, 1, 0
        %v781 = vsel %vm765, 1, 0
        %v782 = vsel %vm766, 1, 0
        %v783 = vsel %vm767, 1, 0
        %v784 = vsel %vm768, 1, 0
        %v785 = vsel %vm769, 1, 0
        %v786 = vsel %vm770, 1, 0
        %v787 = vsel %vm771, 1, 0
        %v788 = vsel %vm772, 1, 0
        %v789 = vsel %vm773, 1, 0
        %v790 = vsel %vm774, 1, 0
        %v791 = vcvt.s32.f32 %v775
        %v792 = vcvt.s32.f32 %v776
        %v793 = vcvt.s32.f32 %v777
        %v794 = vcvt.s32.f32 %v778
        %v795 = vcvt.s32.f32 %v779
        %v796 = vcvt.s32.f32 %v780
        %v797 = vcvt.s32.f32 %v781
        %v798 = vcvt.s32.f32 %v782
        %v799 = vcvt.s32.f32 %v783
        %v800 = vcvt.s32.f32 %v784
        %v801 = vcvt.s32.f32 %v785
        %v802 = vcvt.s32.f32 %v786
        %v803 = vcvt.s32.f32 %v787
        %v804 = vcvt.s32.f32 %v788
        %v805 = vcvt.s32.f32 %v789
        %v806 = vcvt.s32.f32 %v790
        %v807 = vsub.f32 %v739, %v791
        %v808 = vsub.f32 %v740, %v792
        %v809 = vsub.f32 %v741, %v793
        %v810 = vsub.f32 %v742, %v794
        %v811 = vsub.f32 %v743, %v795
        %v812 = vsub.f32 %v744, %v796
        %v813 = vsub.f32 %v745, %v797
        %v814 = vsub.f32 %v746, %v798
        %v815 = vsub.f32 %v747, %v799
        %v816 = vsub.f32 %v748, %v800
        %v817 = vsub.f32 %v749, %v801
        %v818 = vsub.f32 %v750, %v802
        %v819 = vsub.f32 %v751, %v803
        %v820 = vsub.f32 %v752, %v804
        %v821 = vsub.f32 %v753, %v805
        %v822 = vsub.f32 %v754, %v806
        %v823 = vpack.c.bf16 %v808, %v807
        %v824 = vpack.c.bf16 %v810, %v809
        %v825 = vpack.c.bf16 %v812, %v811
        %v826 = vpack.c.bf16 %v814, %v813
        %v827 = vpack.c.bf16 %v816, %v815
        %v828 = vpack.c.bf16 %v818, %v817
        %v829 = vpack.c.bf16 %v820, %v819
        %v830 = vpack.c.bf16 %v822, %v821
        %v831 = vlaneseq
        %v832 = vshrl.u32 %v831, 7
        %v833 = vsub.s32 4, %v832
        %v834 = vrot.slane %v298, %v833
        %vm835 = vcmp.eq.s32.totalorder %v303, %v834
        %vm836 = vcmp.eq.s32.totalorder %v304, %v834
        %vm837 = vcmp.eq.s32.totalorder %v305, %v834
        %vm838 = vcmp.eq.s32.totalorder %v306, %v834
        %vm839 = vcmp.eq.s32.totalorder %v307, %v834
        %vm840 = vcmp.eq.s32.totalorder %v308, %v834
        %vm841 = vcmp.eq.s32.totalorder %v309, %v834
        %vm842 = vcmp.eq.s32.totalorder %v310, %v834
        %vm843 = vcmp.eq.s32.totalorder %v311, %v834
        %vm844 = vcmp.eq.s32.totalorder %v312, %v834
        %vm845 = vcmp.eq.s32.totalorder %v313, %v834
        %vm846 = vcmp.eq.s32.totalorder %v314, %v834
        %vm847 = vcmp.eq.s32.totalorder %v315, %v834
        %vm848 = vcmp.eq.s32.totalorder %v316, %v834
        %vm849 = vcmp.eq.s32.totalorder %v317, %v834
        %vm850 = vcmp.eq.s32.totalorder %v318, %v834
        %v851 = vsel %vm835, 1, 0
        %v852 = vsel %vm836, 1, 0
        %v853 = vsel %vm837, 1, 0
        %v854 = vsel %vm838, 1, 0
        %v855 = vsel %vm839, 1, 0
        %v856 = vsel %vm840, 1, 0
        %v857 = vsel %vm841, 1, 0
        %v858 = vsel %vm842, 1, 0
        %v859 = vsel %vm843, 1, 0
        %v860 = vsel %vm844, 1, 0
        %v861 = vsel %vm845, 1, 0
        %v862 = vsel %vm846, 1, 0
        %v863 = vsel %vm847, 1, 0
        %v864 = vsel %vm848, 1, 0
        %v865 = vsel %vm849, 1, 0
        %v866 = vsel %vm850, 1, 0
        %v867 = vcvt.s32.f32 %v851
        %v868 = vcvt.s32.f32 %v852
        %v869 = vcvt.s32.f32 %v853
        %v870 = vcvt.s32.f32 %v854
        %v871 = vcvt.s32.f32 %v855
        %v872 = vcvt.s32.f32 %v856
        %v873 = vcvt.s32.f32 %v857
        %v874 = vcvt.s32.f32 %v858
        %v875 = vcvt.s32.f32 %v859
        %v876 = vcvt.s32.f32 %v860
        %v877 = vcvt.s32.f32 %v861
        %v878 = vcvt.s32.f32 %v862
        %v879 = vcvt.s32.f32 %v863
        %v880 = vcvt.s32.f32 %v864
        %v881 = vcvt.s32.f32 %v865
        %v882 = vcvt.s32.f32 %v866
        %v883 = vlaneseq
        %v884 = vshrl.u32 %v883, 7
        %v885 = vsub.s32 4, %v884
        %v886 = vrot.slane %v300, %v885
        %vm887 = vcmp.eq.s32.totalorder %v303, %v886
        %vm888 = vcmp.eq.s32.totalorder %v304, %v886
        %vm889 = vcmp.eq.s32.totalorder %v305, %v886
        %vm890 = vcmp.eq.s32.totalorder %v306, %v886
        %vm891 = vcmp.eq.s32.totalorder %v307, %v886
        %vm892 = vcmp.eq.s32.totalorder %v308, %v886
        %vm893 = vcmp.eq.s32.totalorder %v309, %v886
        %vm894 = vcmp.eq.s32.totalorder %v310, %v886
        %vm895 = vcmp.eq.s32.totalorder %v311, %v886
        %vm896 = vcmp.eq.s32.totalorder %v312, %v886
        %vm897 = vcmp.eq.s32.totalorder %v313, %v886
        %vm898 = vcmp.eq.s32.totalorder %v314, %v886
        %vm899 = vcmp.eq.s32.totalorder %v315, %v886
        %vm900 = vcmp.eq.s32.totalorder %v316, %v886
        %vm901 = vcmp.eq.s32.totalorder %v317, %v886
        %vm902 = vcmp.eq.s32.totalorder %v318, %v886
        %v903 = vsel %vm887, 1, 0
        %v904 = vsel %vm888, 1, 0
        %v905 = vsel %vm889, 1, 0
        %v906 = vsel %vm890, 1, 0
        %v907 = vsel %vm891, 1, 0
        %v908 = vsel %vm892, 1, 0
        %v909 = vsel %vm893, 1, 0
        %v910 = vsel %vm894, 1, 0
        %v911 = vsel %vm895, 1, 0
        %v912 = vsel %vm896, 1, 0
        %v913 = vsel %vm897, 1, 0
        %v914 = vsel %vm898, 1, 0
        %v915 = vsel %vm899, 1, 0
        %v916 = vsel %vm900, 1, 0
        %v917 = vsel %vm901, 1, 0
        %v918 = vsel %vm902, 1, 0
        %v919 = vcvt.s32.f32 %v903
        %v920 = vcvt.s32.f32 %v904
        %v921 = vcvt.s32.f32 %v905
        %v922 = vcvt.s32.f32 %v906
        %v923 = vcvt.s32.f32 %v907
        %v924 = vcvt.s32.f32 %v908
        %v925 = vcvt.s32.f32 %v909
        %v926 = vcvt.s32.f32 %v910
        %v927 = vcvt.s32.f32 %v911
        %v928 = vcvt.s32.f32 %v912
        %v929 = vcvt.s32.f32 %v913
        %v930 = vcvt.s32.f32 %v914
        %v931 = vcvt.s32.f32 %v915
        %v932 = vcvt.s32.f32 %v916
        %v933 = vcvt.s32.f32 %v917
        %v934 = vcvt.s32.f32 %v918
        %v935 = vsub.f32 %v867, %v919
        %v936 = vsub.f32 %v868, %v920
        %v937 = vsub.f32 %v869, %v921
        %v938 = vsub.f32 %v870, %v922
        %v939 = vsub.f32 %v871, %v923
        %v940 = vsub.f32 %v872, %v924
        %v941 = vsub.f32 %v873, %v925
        %v942 = vsub.f32 %v874, %v926
        %v943 = vsub.f32 %v875, %v927
        %v944 = vsub.f32 %v876, %v928
        %v945 = vsub.f32 %v877, %v929
        %v946 = vsub.f32 %v878, %v930
        %v947 = vsub.f32 %v879, %v931
        %v948 = vsub.f32 %v880, %v932
        %v949 = vsub.f32 %v881, %v933
        %v950 = vsub.f32 %v882, %v934
        %v951 = vpack.c.bf16 %v936, %v935
        %v952 = vpack.c.bf16 %v938, %v937
        %v953 = vpack.c.bf16 %v940, %v939
        %v954 = vpack.c.bf16 %v942, %v941
        %v955 = vpack.c.bf16 %v944, %v943
        %v956 = vpack.c.bf16 %v946, %v945
        %v957 = vpack.c.bf16 %v948, %v947
        %v958 = vpack.c.bf16 %v950, %v949
        %v959 = vlaneseq
        %v960 = vshrl.u32 %v959, 7
        %v961 = vsub.s32 5, %v960
        %v962 = vrot.slane %v298, %v961
        %vm963 = vcmp.eq.s32.totalorder %v303, %v962
        %vm964 = vcmp.eq.s32.totalorder %v304, %v962
        %vm965 = vcmp.eq.s32.totalorder %v305, %v962
        %vm966 = vcmp.eq.s32.totalorder %v306, %v962
        %vm967 = vcmp.eq.s32.totalorder %v307, %v962
        %vm968 = vcmp.eq.s32.totalorder %v308, %v962
        %vm969 = vcmp.eq.s32.totalorder %v309, %v962
        %vm970 = vcmp.eq.s32.totalorder %v310, %v962
        %vm971 = vcmp.eq.s32.totalorder %v311, %v962
        %vm972 = vcmp.eq.s32.totalorder %v312, %v962
        %vm973 = vcmp.eq.s32.totalorder %v313, %v962
        %vm974 = vcmp.eq.s32.totalorder %v314, %v962
        %vm975 = vcmp.eq.s32.totalorder %v315, %v962
        %vm976 = vcmp.eq.s32.totalorder %v316, %v962
        %vm977 = vcmp.eq.s32.totalorder %v317, %v962
        %vm978 = vcmp.eq.s32.totalorder %v318, %v962
        %v979 = vsel %vm963, 1, 0
        %v980 = vsel %vm964, 1, 0
        %v981 = vsel %vm965, 1, 0
        %v982 = vsel %vm966, 1, 0
        %v983 = vsel %vm967, 1, 0
        %v984 = vsel %vm968, 1, 0
        %v985 = vsel %vm969, 1, 0
        %v986 = vsel %vm970, 1, 0
        %v987 = vsel %vm971, 1, 0
        %v988 = vsel %vm972, 1, 0
        %v989 = vsel %vm973, 1, 0
        %v990 = vsel %vm974, 1, 0
        %v991 = vsel %vm975, 1, 0
        %v992 = vsel %vm976, 1, 0
        %v993 = vsel %vm977, 1, 0
        %v994 = vsel %vm978, 1, 0
        %v995 = vcvt.s32.f32 %v979
        %v996 = vcvt.s32.f32 %v980
        %v997 = vcvt.s32.f32 %v981
        %v998 = vcvt.s32.f32 %v982
        %v999 = vcvt.s32.f32 %v983
        %v1000 = vcvt.s32.f32 %v984
        %v1001 = vcvt.s32.f32 %v985
        %v1002 = vcvt.s32.f32 %v986
        %v1003 = vcvt.s32.f32 %v987
        %v1004 = vcvt.s32.f32 %v988
        %v1005 = vcvt.s32.f32 %v989
        %v1006 = vcvt.s32.f32 %v990
        %v1007 = vcvt.s32.f32 %v991
        %v1008 = vcvt.s32.f32 %v992
        %v1009 = vcvt.s32.f32 %v993
        %v1010 = vcvt.s32.f32 %v994
        %v1011 = vlaneseq
        %v1012 = vshrl.u32 %v1011, 7
        %v1013 = vsub.s32 5, %v1012
        %v1014 = vrot.slane %v300, %v1013
        %vm1015 = vcmp.eq.s32.totalorder %v303, %v1014
        %vm1016 = vcmp.eq.s32.totalorder %v304, %v1014
        %vm1017 = vcmp.eq.s32.totalorder %v305, %v1014
        %vm1018 = vcmp.eq.s32.totalorder %v306, %v1014
        %vm1019 = vcmp.eq.s32.totalorder %v307, %v1014
        %vm1020 = vcmp.eq.s32.totalorder %v308, %v1014
        %vm1021 = vcmp.eq.s32.totalorder %v309, %v1014
        %vm1022 = vcmp.eq.s32.totalorder %v310, %v1014
        %vm1023 = vcmp.eq.s32.totalorder %v311, %v1014
        %vm1024 = vcmp.eq.s32.totalorder %v312, %v1014
        %vm1025 = vcmp.eq.s32.totalorder %v313, %v1014
        %vm1026 = vcmp.eq.s32.totalorder %v314, %v1014
        %vm1027 = vcmp.eq.s32.totalorder %v315, %v1014
        %vm1028 = vcmp.eq.s32.totalorder %v316, %v1014
        %vm1029 = vcmp.eq.s32.totalorder %v317, %v1014
        %vm1030 = vcmp.eq.s32.totalorder %v318, %v1014
        %v1031 = vsel %vm1015, 1, 0
        %v1032 = vsel %vm1016, 1, 0
        %v1033 = vsel %vm1017, 1, 0
        %v1034 = vsel %vm1018, 1, 0
        %v1035 = vsel %vm1019, 1, 0
        %v1036 = vsel %vm1020, 1, 0
        %v1037 = vsel %vm1021, 1, 0
        %v1038 = vsel %vm1022, 1, 0
        %v1039 = vsel %vm1023, 1, 0
        %v1040 = vsel %vm1024, 1, 0
        %v1041 = vsel %vm1025, 1, 0
        %v1042 = vsel %vm1026, 1, 0
        %v1043 = vsel %vm1027, 1, 0
        %v1044 = vsel %vm1028, 1, 0
        %v1045 = vsel %vm1029, 1, 0
        %v1046 = vsel %vm1030, 1, 0
        %v1047 = vcvt.s32.f32 %v1031
        %v1048 = vcvt.s32.f32 %v1032
        %v1049 = vcvt.s32.f32 %v1033
        %v1050 = vcvt.s32.f32 %v1034
        %v1051 = vcvt.s32.f32 %v1035
        %v1052 = vcvt.s32.f32 %v1036
        %v1053 = vcvt.s32.f32 %v1037
        %v1054 = vcvt.s32.f32 %v1038
        %v1055 = vcvt.s32.f32 %v1039
        %v1056 = vcvt.s32.f32 %v1040
        %v1057 = vcvt.s32.f32 %v1041
        %v1058 = vcvt.s32.f32 %v1042
        %v1059 = vcvt.s32.f32 %v1043
        %v1060 = vcvt.s32.f32 %v1044
        %v1061 = vcvt.s32.f32 %v1045
        %v1062 = vcvt.s32.f32 %v1046
        %v1063 = vsub.f32 %v995, %v1047
        %v1064 = vsub.f32 %v996, %v1048
        %v1065 = vsub.f32 %v997, %v1049
        %v1066 = vsub.f32 %v998, %v1050
        %v1067 = vsub.f32 %v999, %v1051
        %v1068 = vsub.f32 %v1000, %v1052
        %v1069 = vsub.f32 %v1001, %v1053
        %v1070 = vsub.f32 %v1002, %v1054
        %v1071 = vsub.f32 %v1003, %v1055
        %v1072 = vsub.f32 %v1004, %v1056
        %v1073 = vsub.f32 %v1005, %v1057
        %v1074 = vsub.f32 %v1006, %v1058
        %v1075 = vsub.f32 %v1007, %v1059
        %v1076 = vsub.f32 %v1008, %v1060
        %v1077 = vsub.f32 %v1009, %v1061
        %v1078 = vsub.f32 %v1010, %v1062
        %v1079 = vpack.c.bf16 %v1064, %v1063
        %v1080 = vpack.c.bf16 %v1066, %v1065
        %v1081 = vpack.c.bf16 %v1068, %v1067
        %v1082 = vpack.c.bf16 %v1070, %v1069
        %v1083 = vpack.c.bf16 %v1072, %v1071
        %v1084 = vpack.c.bf16 %v1074, %v1073
        %v1085 = vpack.c.bf16 %v1076, %v1075
        %v1086 = vpack.c.bf16 %v1078, %v1077
        %v1087 = vlaneseq
        %v1088 = vshrl.u32 %v1087, 7
        %v1089 = vsub.s32 6, %v1088
        %v1090 = vrot.slane %v298, %v1089
        %vm1091 = vcmp.eq.s32.totalorder %v303, %v1090
        %vm1092 = vcmp.eq.s32.totalorder %v304, %v1090
        %vm1093 = vcmp.eq.s32.totalorder %v305, %v1090
        %vm1094 = vcmp.eq.s32.totalorder %v306, %v1090
        %vm1095 = vcmp.eq.s32.totalorder %v307, %v1090
        %vm1096 = vcmp.eq.s32.totalorder %v308, %v1090
        %vm1097 = vcmp.eq.s32.totalorder %v309, %v1090
        %vm1098 = vcmp.eq.s32.totalorder %v310, %v1090
        %vm1099 = vcmp.eq.s32.totalorder %v311, %v1090
        %vm1100 = vcmp.eq.s32.totalorder %v312, %v1090
        %vm1101 = vcmp.eq.s32.totalorder %v313, %v1090
        %vm1102 = vcmp.eq.s32.totalorder %v314, %v1090
        %vm1103 = vcmp.eq.s32.totalorder %v315, %v1090
        %vm1104 = vcmp.eq.s32.totalorder %v316, %v1090
        %vm1105 = vcmp.eq.s32.totalorder %v317, %v1090
        %vm1106 = vcmp.eq.s32.totalorder %v318, %v1090
        %v1107 = vsel %vm1091, 1, 0
        %v1108 = vsel %vm1092, 1, 0
        %v1109 = vsel %vm1093, 1, 0
        %v1110 = vsel %vm1094, 1, 0
        %v1111 = vsel %vm1095, 1, 0
        %v1112 = vsel %vm1096, 1, 0
        %v1113 = vsel %vm1097, 1, 0
        %v1114 = vsel %vm1098, 1, 0
        %v1115 = vsel %vm1099, 1, 0
        %v1116 = vsel %vm1100, 1, 0
        %v1117 = vsel %vm1101, 1, 0
        %v1118 = vsel %vm1102, 1, 0
        %v1119 = vsel %vm1103, 1, 0
        %v1120 = vsel %vm1104, 1, 0
        %v1121 = vsel %vm1105, 1, 0
        %v1122 = vsel %vm1106, 1, 0
        %v1123 = vcvt.s32.f32 %v1107
        %v1124 = vcvt.s32.f32 %v1108
        %v1125 = vcvt.s32.f32 %v1109
        %v1126 = vcvt.s32.f32 %v1110
        %v1127 = vcvt.s32.f32 %v1111
        %v1128 = vcvt.s32.f32 %v1112
        %v1129 = vcvt.s32.f32 %v1113
        %v1130 = vcvt.s32.f32 %v1114
        %v1131 = vcvt.s32.f32 %v1115
        %v1132 = vcvt.s32.f32 %v1116
        %v1133 = vcvt.s32.f32 %v1117
        %v1134 = vcvt.s32.f32 %v1118
        %v1135 = vcvt.s32.f32 %v1119
        %v1136 = vcvt.s32.f32 %v1120
        %v1137 = vcvt.s32.f32 %v1121
        %v1138 = vcvt.s32.f32 %v1122
        %v1139 = vlaneseq
        %v1140 = vshrl.u32 %v1139, 7
        %v1141 = vsub.s32 6, %v1140
        %v1142 = vrot.slane %v300, %v1141
        %vm1143 = vcmp.eq.s32.totalorder %v303, %v1142
        %vm1144 = vcmp.eq.s32.totalorder %v304, %v1142
        %vm1145 = vcmp.eq.s32.totalorder %v305, %v1142
        %vm1146 = vcmp.eq.s32.totalorder %v306, %v1142
        %vm1147 = vcmp.eq.s32.totalorder %v307, %v1142
        %vm1148 = vcmp.eq.s32.totalorder %v308, %v1142
        %vm1149 = vcmp.eq.s32.totalorder %v309, %v1142
        %vm1150 = vcmp.eq.s32.totalorder %v310, %v1142
        %vm1151 = vcmp.eq.s32.totalorder %v311, %v1142
        %vm1152 = vcmp.eq.s32.totalorder %v312, %v1142
        %vm1153 = vcmp.eq.s32.totalorder %v313, %v1142
        %vm1154 = vcmp.eq.s32.totalorder %v314, %v1142
        %vm1155 = vcmp.eq.s32.totalorder %v315, %v1142
        %vm1156 = vcmp.eq.s32.totalorder %v316, %v1142
        %vm1157 = vcmp.eq.s32.totalorder %v317, %v1142
        %vm1158 = vcmp.eq.s32.totalorder %v318, %v1142
        %v1159 = vsel %vm1143, 1, 0
        %v1160 = vsel %vm1144, 1, 0
        %v1161 = vsel %vm1145, 1, 0
        %v1162 = vsel %vm1146, 1, 0
        %v1163 = vsel %vm1147, 1, 0
        %v1164 = vsel %vm1148, 1, 0
        %v1165 = vsel %vm1149, 1, 0
        %v1166 = vsel %vm1150, 1, 0
        %v1167 = vsel %vm1151, 1, 0
        %v1168 = vsel %vm1152, 1, 0
        %v1169 = vsel %vm1153, 1, 0
        %v1170 = vsel %vm1154, 1, 0
        %v1171 = vsel %vm1155, 1, 0
        %v1172 = vsel %vm1156, 1, 0
        %v1173 = vsel %vm1157, 1, 0
        %v1174 = vsel %vm1158, 1, 0
        %v1175 = vcvt.s32.f32 %v1159
        %v1176 = vcvt.s32.f32 %v1160
        %v1177 = vcvt.s32.f32 %v1161
        %v1178 = vcvt.s32.f32 %v1162
        %v1179 = vcvt.s32.f32 %v1163
        %v1180 = vcvt.s32.f32 %v1164
        %v1181 = vcvt.s32.f32 %v1165
        %v1182 = vcvt.s32.f32 %v1166
        %v1183 = vcvt.s32.f32 %v1167
        %v1184 = vcvt.s32.f32 %v1168
        %v1185 = vcvt.s32.f32 %v1169
        %v1186 = vcvt.s32.f32 %v1170
        %v1187 = vcvt.s32.f32 %v1171
        %v1188 = vcvt.s32.f32 %v1172
        %v1189 = vcvt.s32.f32 %v1173
        %v1190 = vcvt.s32.f32 %v1174
        %v1191 = vsub.f32 %v1123, %v1175
        %v1192 = vsub.f32 %v1124, %v1176
        %v1193 = vsub.f32 %v1125, %v1177
        %v1194 = vsub.f32 %v1126, %v1178
        %v1195 = vsub.f32 %v1127, %v1179
        %v1196 = vsub.f32 %v1128, %v1180
        %v1197 = vsub.f32 %v1129, %v1181
        %v1198 = vsub.f32 %v1130, %v1182
        %v1199 = vsub.f32 %v1131, %v1183
        %v1200 = vsub.f32 %v1132, %v1184
        %v1201 = vsub.f32 %v1133, %v1185
        %v1202 = vsub.f32 %v1134, %v1186
        %v1203 = vsub.f32 %v1135, %v1187
        %v1204 = vsub.f32 %v1136, %v1188
        %v1205 = vsub.f32 %v1137, %v1189
        %v1206 = vsub.f32 %v1138, %v1190
        %v1207 = vpack.c.bf16 %v1192, %v1191
        %v1208 = vpack.c.bf16 %v1194, %v1193
        %v1209 = vpack.c.bf16 %v1196, %v1195
        %v1210 = vpack.c.bf16 %v1198, %v1197
        %v1211 = vpack.c.bf16 %v1200, %v1199
        %v1212 = vpack.c.bf16 %v1202, %v1201
        %v1213 = vpack.c.bf16 %v1204, %v1203
        %v1214 = vpack.c.bf16 %v1206, %v1205
        %v1215 = vlaneseq
        %v1216 = vshrl.u32 %v1215, 7
        %v1217 = vsub.s32 7, %v1216
        %v1218 = vrot.slane %v298, %v1217
        %vm1219 = vcmp.eq.s32.totalorder %v303, %v1218
        %vm1220 = vcmp.eq.s32.totalorder %v304, %v1218
        %vm1221 = vcmp.eq.s32.totalorder %v305, %v1218
        %vm1222 = vcmp.eq.s32.totalorder %v306, %v1218
        %vm1223 = vcmp.eq.s32.totalorder %v307, %v1218
        %vm1224 = vcmp.eq.s32.totalorder %v308, %v1218
        %vm1225 = vcmp.eq.s32.totalorder %v309, %v1218
        %vm1226 = vcmp.eq.s32.totalorder %v310, %v1218
        %vm1227 = vcmp.eq.s32.totalorder %v311, %v1218
        %vm1228 = vcmp.eq.s32.totalorder %v312, %v1218
        %vm1229 = vcmp.eq.s32.totalorder %v313, %v1218
        %vm1230 = vcmp.eq.s32.totalorder %v314, %v1218
        %vm1231 = vcmp.eq.s32.totalorder %v315, %v1218
        %vm1232 = vcmp.eq.s32.totalorder %v316, %v1218
        %vm1233 = vcmp.eq.s32.totalorder %v317, %v1218
        %vm1234 = vcmp.eq.s32.totalorder %v318, %v1218
        %v1235 = vsel %vm1219, 1, 0
        %v1236 = vsel %vm1220, 1, 0
        %v1237 = vsel %vm1221, 1, 0
        %v1238 = vsel %vm1222, 1, 0
        %v1239 = vsel %vm1223, 1, 0
        %v1240 = vsel %vm1224, 1, 0
        %v1241 = vsel %vm1225, 1, 0
        %v1242 = vsel %vm1226, 1, 0
        %v1243 = vsel %vm1227, 1, 0
        %v1244 = vsel %vm1228, 1, 0
        %v1245 = vsel %vm1229, 1, 0
        %v1246 = vsel %vm1230, 1, 0
        %v1247 = vsel %vm1231, 1, 0
        %v1248 = vsel %vm1232, 1, 0
        %v1249 = vsel %vm1233, 1, 0
        %v1250 = vsel %vm1234, 1, 0
        %v1251 = vcvt.s32.f32 %v1235
        %v1252 = vcvt.s32.f32 %v1236
        %v1253 = vcvt.s32.f32 %v1237
        %v1254 = vcvt.s32.f32 %v1238
        %v1255 = vcvt.s32.f32 %v1239
        %v1256 = vcvt.s32.f32 %v1240
        %v1257 = vcvt.s32.f32 %v1241
        %v1258 = vcvt.s32.f32 %v1242
        %v1259 = vcvt.s32.f32 %v1243
        %v1260 = vcvt.s32.f32 %v1244
        %v1261 = vcvt.s32.f32 %v1245
        %v1262 = vcvt.s32.f32 %v1246
        %v1263 = vcvt.s32.f32 %v1247
        %v1264 = vcvt.s32.f32 %v1248
        %v1265 = vcvt.s32.f32 %v1249
        %v1266 = vcvt.s32.f32 %v1250
        %v1267 = vlaneseq
        %v1268 = vshrl.u32 %v1267, 7
        %v1269 = vsub.s32 7, %v1268
        %v1270 = vrot.slane %v300, %v1269
        %vm1271 = vcmp.eq.s32.totalorder %v303, %v1270
        %vm1272 = vcmp.eq.s32.totalorder %v304, %v1270
        %vm1273 = vcmp.eq.s32.totalorder %v305, %v1270
        %vm1274 = vcmp.eq.s32.totalorder %v306, %v1270
        %vm1275 = vcmp.eq.s32.totalorder %v307, %v1270
        %vm1276 = vcmp.eq.s32.totalorder %v308, %v1270
        %vm1277 = vcmp.eq.s32.totalorder %v309, %v1270
        %vm1278 = vcmp.eq.s32.totalorder %v310, %v1270
        %vm1279 = vcmp.eq.s32.totalorder %v311, %v1270
        %vm1280 = vcmp.eq.s32.totalorder %v312, %v1270
        %vm1281 = vcmp.eq.s32.totalorder %v313, %v1270
        %vm1282 = vcmp.eq.s32.totalorder %v314, %v1270
        %vm1283 = vcmp.eq.s32.totalorder %v315, %v1270
        %vm1284 = vcmp.eq.s32.totalorder %v316, %v1270
        %vm1285 = vcmp.eq.s32.totalorder %v317, %v1270
        %vm1286 = vcmp.eq.s32.totalorder %v318, %v1270
        %v1287 = vsel %vm1271, 1, 0
        %v1288 = vsel %vm1272, 1, 0
        %v1289 = vsel %vm1273, 1, 0
        %v1290 = vsel %vm1274, 1, 0
        %v1291 = vsel %vm1275, 1, 0
        %v1292 = vsel %vm1276, 1, 0
        %v1293 = vsel %vm1277, 1, 0
        %v1294 = vsel %vm1278, 1, 0
        %v1295 = vsel %vm1279, 1, 0
        %v1296 = vsel %vm1280, 1, 0
        %v1297 = vsel %vm1281, 1, 0
        %v1298 = vsel %vm1282, 1, 0
        %v1299 = vsel %vm1283, 1, 0
        %v1300 = vsel %vm1284, 1, 0
        %v1301 = vsel %vm1285, 1, 0
        %v1302 = vsel %vm1286, 1, 0
        %v1303 = vcvt.s32.f32 %v1287
        %v1304 = vcvt.s32.f32 %v1288
        %v1305 = vcvt.s32.f32 %v1289
        %v1306 = vcvt.s32.f32 %v1290
        %v1307 = vcvt.s32.f32 %v1291
        %v1308 = vcvt.s32.f32 %v1292
        %v1309 = vcvt.s32.f32 %v1293
        %v1310 = vcvt.s32.f32 %v1294
        %v1311 = vcvt.s32.f32 %v1295
        %v1312 = vcvt.s32.f32 %v1296
        %v1313 = vcvt.s32.f32 %v1297
        %v1314 = vcvt.s32.f32 %v1298
        %v1315 = vcvt.s32.f32 %v1299
        %v1316 = vcvt.s32.f32 %v1300
        %v1317 = vcvt.s32.f32 %v1301
        %v1318 = vcvt.s32.f32 %v1302
        %v1319 = vsub.f32 %v1251, %v1303
        %v1320 = vsub.f32 %v1252, %v1304
        %v1321 = vsub.f32 %v1253, %v1305
        %v1322 = vsub.f32 %v1254, %v1306
        %v1323 = vsub.f32 %v1255, %v1307
        %v1324 = vsub.f32 %v1256, %v1308
        %v1325 = vsub.f32 %v1257, %v1309
        %v1326 = vsub.f32 %v1258, %v1310
        %v1327 = vsub.f32 %v1259, %v1311
        %v1328 = vsub.f32 %v1260, %v1312
        %v1329 = vsub.f32 %v1261, %v1313
        %v1330 = vsub.f32 %v1262, %v1314
        %v1331 = vsub.f32 %v1263, %v1315
        %v1332 = vsub.f32 %v1264, %v1316
        %v1333 = vsub.f32 %v1265, %v1317
        %v1334 = vsub.f32 %v1266, %v1318
        %v1335 = vpack.c.bf16 %v1320, %v1319
        %v1336 = vpack.c.bf16 %v1322, %v1321
        %v1337 = vpack.c.bf16 %v1324, %v1323
        %v1338 = vpack.c.bf16 %v1326, %v1325
        %v1339 = vpack.c.bf16 %v1328, %v1327
        %v1340 = vpack.c.bf16 %v1330, %v1329
        %v1341 = vpack.c.bf16 %v1332, %v1331
        %v1342 = vpack.c.bf16 %v1334, %v1333
        %v1343 = vlaneseq
        %v1344 = vshrl.u32 %v1343, 7
        %v1345 = vsub.s32 0, %v1344
        %v1346 = vrot.slane %v299, %v1345
        %vm1347 = vcmp.eq.s32.totalorder %v303, %v1346
        %vm1348 = vcmp.eq.s32.totalorder %v304, %v1346
        %vm1349 = vcmp.eq.s32.totalorder %v305, %v1346
        %vm1350 = vcmp.eq.s32.totalorder %v306, %v1346
        %vm1351 = vcmp.eq.s32.totalorder %v307, %v1346
        %vm1352 = vcmp.eq.s32.totalorder %v308, %v1346
        %vm1353 = vcmp.eq.s32.totalorder %v309, %v1346
        %vm1354 = vcmp.eq.s32.totalorder %v310, %v1346
        %vm1355 = vcmp.eq.s32.totalorder %v311, %v1346
        %vm1356 = vcmp.eq.s32.totalorder %v312, %v1346
        %vm1357 = vcmp.eq.s32.totalorder %v313, %v1346
        %vm1358 = vcmp.eq.s32.totalorder %v314, %v1346
        %vm1359 = vcmp.eq.s32.totalorder %v315, %v1346
        %vm1360 = vcmp.eq.s32.totalorder %v316, %v1346
        %vm1361 = vcmp.eq.s32.totalorder %v317, %v1346
        %vm1362 = vcmp.eq.s32.totalorder %v318, %v1346
        %v1363 = vsel %vm1347, 1, 0
        %v1364 = vsel %vm1348, 1, 0
        %v1365 = vsel %vm1349, 1, 0
        %v1366 = vsel %vm1350, 1, 0
        %v1367 = vsel %vm1351, 1, 0
        %v1368 = vsel %vm1352, 1, 0
        %v1369 = vsel %vm1353, 1, 0
        %v1370 = vsel %vm1354, 1, 0
        %v1371 = vsel %vm1355, 1, 0
        %v1372 = vsel %vm1356, 1, 0
        %v1373 = vsel %vm1357, 1, 0
        %v1374 = vsel %vm1358, 1, 0
        %v1375 = vsel %vm1359, 1, 0
        %v1376 = vsel %vm1360, 1, 0
        %v1377 = vsel %vm1361, 1, 0
        %v1378 = vsel %vm1362, 1, 0
        %v1379 = vcvt.s32.f32 %v1363
        %v1380 = vcvt.s32.f32 %v1364
        %v1381 = vcvt.s32.f32 %v1365
        %v1382 = vcvt.s32.f32 %v1366
        %v1383 = vcvt.s32.f32 %v1367
        %v1384 = vcvt.s32.f32 %v1368
        %v1385 = vcvt.s32.f32 %v1369
        %v1386 = vcvt.s32.f32 %v1370
        %v1387 = vcvt.s32.f32 %v1371
        %v1388 = vcvt.s32.f32 %v1372
        %v1389 = vcvt.s32.f32 %v1373
        %v1390 = vcvt.s32.f32 %v1374
        %v1391 = vcvt.s32.f32 %v1375
        %v1392 = vcvt.s32.f32 %v1376
        %v1393 = vcvt.s32.f32 %v1377
        %v1394 = vcvt.s32.f32 %v1378
        %v1395 = vlaneseq
        %v1396 = vshrl.u32 %v1395, 7
        %v1397 = vsub.s32 0, %v1396
        %v1398 = vrot.slane %v301, %v1397
        %vm1399 = vcmp.eq.s32.totalorder %v303, %v1398
        %vm1400 = vcmp.eq.s32.totalorder %v304, %v1398
        %vm1401 = vcmp.eq.s32.totalorder %v305, %v1398
        %vm1402 = vcmp.eq.s32.totalorder %v306, %v1398
        %vm1403 = vcmp.eq.s32.totalorder %v307, %v1398
        %vm1404 = vcmp.eq.s32.totalorder %v308, %v1398
        %vm1405 = vcmp.eq.s32.totalorder %v309, %v1398
        %vm1406 = vcmp.eq.s32.totalorder %v310, %v1398
        %vm1407 = vcmp.eq.s32.totalorder %v311, %v1398
        %vm1408 = vcmp.eq.s32.totalorder %v312, %v1398
        %vm1409 = vcmp.eq.s32.totalorder %v313, %v1398
        %vm1410 = vcmp.eq.s32.totalorder %v314, %v1398
        %vm1411 = vcmp.eq.s32.totalorder %v315, %v1398
        %vm1412 = vcmp.eq.s32.totalorder %v316, %v1398
        %vm1413 = vcmp.eq.s32.totalorder %v317, %v1398
        %vm1414 = vcmp.eq.s32.totalorder %v318, %v1398
        %v1415 = vsel %vm1399, 1, 0
        %v1416 = vsel %vm1400, 1, 0
        %v1417 = vsel %vm1401, 1, 0
        %v1418 = vsel %vm1402, 1, 0
        %v1419 = vsel %vm1403, 1, 0
        %v1420 = vsel %vm1404, 1, 0
        %v1421 = vsel %vm1405, 1, 0
        %v1422 = vsel %vm1406, 1, 0
        %v1423 = vsel %vm1407, 1, 0
        %v1424 = vsel %vm1408, 1, 0
        %v1425 = vsel %vm1409, 1, 0
        %v1426 = vsel %vm1410, 1, 0
        %v1427 = vsel %vm1411, 1, 0
        %v1428 = vsel %vm1412, 1, 0
        %v1429 = vsel %vm1413, 1, 0
        %v1430 = vsel %vm1414, 1, 0
        %v1431 = vcvt.s32.f32 %v1415
        %v1432 = vcvt.s32.f32 %v1416
        %v1433 = vcvt.s32.f32 %v1417
        %v1434 = vcvt.s32.f32 %v1418
        %v1435 = vcvt.s32.f32 %v1419
        %v1436 = vcvt.s32.f32 %v1420
        %v1437 = vcvt.s32.f32 %v1421
        %v1438 = vcvt.s32.f32 %v1422
        %v1439 = vcvt.s32.f32 %v1423
        %v1440 = vcvt.s32.f32 %v1424
        %v1441 = vcvt.s32.f32 %v1425
        %v1442 = vcvt.s32.f32 %v1426
        %v1443 = vcvt.s32.f32 %v1427
        %v1444 = vcvt.s32.f32 %v1428
        %v1445 = vcvt.s32.f32 %v1429
        %v1446 = vcvt.s32.f32 %v1430
        %v1447 = vsub.f32 %v1379, %v1431
        %v1448 = vsub.f32 %v1380, %v1432
        %v1449 = vsub.f32 %v1381, %v1433
        %v1450 = vsub.f32 %v1382, %v1434
        %v1451 = vsub.f32 %v1383, %v1435
        %v1452 = vsub.f32 %v1384, %v1436
        %v1453 = vsub.f32 %v1385, %v1437
        %v1454 = vsub.f32 %v1386, %v1438
        %v1455 = vsub.f32 %v1387, %v1439
        %v1456 = vsub.f32 %v1388, %v1440
        %v1457 = vsub.f32 %v1389, %v1441
        %v1458 = vsub.f32 %v1390, %v1442
        %v1459 = vsub.f32 %v1391, %v1443
        %v1460 = vsub.f32 %v1392, %v1444
        %v1461 = vsub.f32 %v1393, %v1445
        %v1462 = vsub.f32 %v1394, %v1446
        %v1463 = vpack.c.bf16 %v1448, %v1447
        %v1464 = vpack.c.bf16 %v1450, %v1449
        %v1465 = vpack.c.bf16 %v1452, %v1451
        %v1466 = vpack.c.bf16 %v1454, %v1453
        %v1467 = vpack.c.bf16 %v1456, %v1455
        %v1468 = vpack.c.bf16 %v1458, %v1457
        %v1469 = vpack.c.bf16 %v1460, %v1459
        %v1470 = vpack.c.bf16 %v1462, %v1461
        %1471 = vmatprep.subr.bf16.mxu0 %v574
        %1472 = vmatpush1.bf16.msra.mxu0 %v446
        %1473 = vmatprep.subr.bf16.mxu0 %v573
        %1474 = vmatpush1.bf16.msra.mxu0 %v445
        %1475 = vmatprep.subr.bf16.mxu0 %v572
        %1476 = vmatpush1.bf16.msra.mxu0 %v444
        %1477 = vmatprep.subr.bf16.mxu0 %v571
        %1478 = vmatpush1.bf16.msra.mxu0 %v443
        %1479 = vmatprep.subr.bf16.mxu0 %v570
        %1480 = vmatpush1.bf16.msra.mxu0 %v442
        %1481 = vmatprep.subr.bf16.mxu0 %v569
        %1482 = vmatpush1.bf16.msra.mxu0 %v441
        %1483 = vmatprep.subr.bf16.mxu0 %v568
        %1484 = vmatpush1.bf16.msra.mxu0 %v440
        %1485 = vmatprep.subr.bf16.mxu0 %v567
        %1486 = vmatpush1.bf16.msra.mxu0 %v439
        %1487 = vmatprep.subr.bf16.mxu0 0
        %1488 = vmatpush2.bf16.msra.mxu0 0
        %1489 = vmatprep.subr.bf16.mxu0 0
        %1490 = vmatpush2.bf16.msra.mxu0 0
        %1491 = vmatprep.subr.bf16.mxu0 0
        %1492 = vmatpush2.bf16.msra.mxu0 0
        %1493 = vmatprep.subr.bf16.mxu0 0
        %1494 = vmatpush2.bf16.msra.mxu0 0
        %1495 = vmatprep.subr.bf16.mxu0 0
        %1496 = vmatpush2.bf16.msra.mxu0 0
        %1497 = vmatprep.subr.bf16.mxu0 0
        %1498 = vmatpush2.bf16.msra.mxu0 0
        %1499 = vmatprep.subr.bf16.mxu0 0
        %1500 = vmatpush2.bf16.msra.mxu0 0
        %1501 = vmatprep.subr.bf16.mxu0 0
        %1502 = vmatpush2.bf16.msra.mxu0 0
        %1503 = vmatprep.mubr.bf16.mxu0 0
        %1504 = vmatmul.mubr.bf16.gmra.mxu0 %v297
        %v1505 = vpop.f32.mrf.mxu0
        %v1506 = vadd.f32 0.0, %v1505
        %v1507 = vpop.f32.mrf.mxu0
        %v1508 = vadd.f32 0.0, %v1507
        %v1509 = vpop.f32.mrf.mxu0
        %v1510 = vpop.f32.mrf.mxu0
        %1511 = vdwg.mxu0
        %1512 = vmatprep.subr.bf16.mxu0 %v830
        %1513 = vmatpush1.bf16.msra.mxu0 %v702
        %1514 = vmatprep.subr.bf16.mxu0 %v829
        %1515 = vmatpush1.bf16.msra.mxu0 %v701
        %1516 = vmatprep.subr.bf16.mxu0 %v828
        %1517 = vmatpush1.bf16.msra.mxu0 %v700
        %1518 = vmatprep.subr.bf16.mxu0 %v827
        %1519 = vmatpush1.bf16.msra.mxu0 %v699
        %1520 = vmatprep.subr.bf16.mxu0 %v826
        %1521 = vmatpush1.bf16.msra.mxu0 %v698
        %1522 = vmatprep.subr.bf16.mxu0 %v825
        %1523 = vmatpush1.bf16.msra.mxu0 %v697
        %1524 = vmatprep.subr.bf16.mxu0 %v824
        %1525 = vmatpush1.bf16.msra.mxu0 %v696
        %1526 = vmatprep.subr.bf16.mxu0 %v823
        %1527 = vmatpush1.bf16.msra.mxu0 %v695
        %1528 = vmatprep.subr.bf16.mxu0 0
        %1529 = vmatpush2.bf16.msra.mxu0 0
        %1530 = vmatprep.subr.bf16.mxu0 0
        %1531 = vmatpush2.bf16.msra.mxu0 0
        %1532 = vmatprep.subr.bf16.mxu0 0
        %1533 = vmatpush2.bf16.msra.mxu0 0
        %1534 = vmatprep.subr.bf16.mxu0 0
        %1535 = vmatpush2.bf16.msra.mxu0 0
        %1536 = vmatprep.subr.bf16.mxu0 0
        %1537 = vmatpush2.bf16.msra.mxu0 0
        %1538 = vmatprep.subr.bf16.mxu0 0
        %1539 = vmatpush2.bf16.msra.mxu0 0
        %1540 = vmatprep.subr.bf16.mxu0 0
        %1541 = vmatpush2.bf16.msra.mxu0 0
        %1542 = vmatprep.subr.bf16.mxu0 0
        %1543 = vmatpush2.bf16.msra.mxu0 0
        %1544 = vmatprep.mubr.bf16.mxu0 0
        %1545 = vmatmul.mubr.bf16.gmra.mxu0 %v297
        %v1546 = vpop.f32.mrf.mxu0
        %v1547 = vadd.f32 0.0, %v1546
        %v1548 = vpop.f32.mrf.mxu0
        %v1549 = vadd.f32 0.0, %v1548
        %v1550 = vpop.f32.mrf.mxu0
        %v1551 = vpop.f32.mrf.mxu0
        %1552 = vdwg.mxu0
        %1553 = vmatprep.subr.bf16.mxu0 %v1086
        %1554 = vmatpush1.bf16.msra.mxu0 %v958
        %1555 = vmatprep.subr.bf16.mxu0 %v1085
        %1556 = vmatpush1.bf16.msra.mxu0 %v957
        %1557 = vmatprep.subr.bf16.mxu0 %v1084
        %1558 = vmatpush1.bf16.msra.mxu0 %v956
        %1559 = vmatprep.subr.bf16.mxu0 %v1083
        %1560 = vmatpush1.bf16.msra.mxu0 %v955
        %1561 = vmatprep.subr.bf16.mxu0 %v1082
        %1562 = vmatpush1.bf16.msra.mxu0 %v954
        %1563 = vmatprep.subr.bf16.mxu0 %v1081
        %1564 = vmatpush1.bf16.msra.mxu0 %v953
        %1565 = vmatprep.subr.bf16.mxu0 %v1080
        %1566 = vmatpush1.bf16.msra.mxu0 %v952
        %1567 = vmatprep.subr.bf16.mxu0 %v1079
        %1568 = vmatpush1.bf16.msra.mxu0 %v951
        %1569 = vmatprep.subr.bf16.mxu0 0
        %1570 = vmatpush2.bf16.msra.mxu0 0
        %1571 = vmatprep.subr.bf16.mxu0 0
        %1572 = vmatpush2.bf16.msra.mxu0 0
        %1573 = vmatprep.subr.bf16.mxu0 0
        %1574 = vmatpush2.bf16.msra.mxu0 0
        %1575 = vmatprep.subr.bf16.mxu0 0
        %1576 = vmatpush2.bf16.msra.mxu0 0
        %1577 = vmatprep.subr.bf16.mxu0 0
        %1578 = vmatpush2.bf16.msra.mxu0 0
        %1579 = vmatprep.subr.bf16.mxu0 0
        %1580 = vmatpush2.bf16.msra.mxu0 0
        %1581 = vmatprep.subr.bf16.mxu0 0
        %1582 = vmatpush2.bf16.msra.mxu0 0
        %1583 = vmatprep.subr.bf16.mxu0 0
        %1584 = vmatpush2.bf16.msra.mxu0 0
        %1585 = vmatprep.mubr.bf16.mxu0 0
        %1586 = vmatmul.mubr.bf16.gmra.mxu0 %v297
        %v1587 = vpop.f32.mrf.mxu0
        %v1588 = vadd.f32 0.0, %v1587
        %v1589 = vpop.f32.mrf.mxu0
        %v1590 = vadd.f32 0.0, %v1589
        %v1591 = vpop.f32.mrf.mxu0
        %v1592 = vpop.f32.mrf.mxu0
        %1593 = vdwg.mxu0
        %1594 = vmatprep.subr.bf16.mxu0 %v1342
        %1595 = vmatpush1.bf16.msra.mxu0 %v1214
        %1596 = vmatprep.subr.bf16.mxu0 %v1341
        %1597 = vmatpush1.bf16.msra.mxu0 %v1213
        %1598 = vmatprep.subr.bf16.mxu0 %v1340
        %1599 = vmatpush1.bf16.msra.mxu0 %v1212
        %1600 = vmatprep.subr.bf16.mxu0 %v1339
        %1601 = vmatpush1.bf16.msra.mxu0 %v1211
        %1602 = vmatprep.subr.bf16.mxu0 %v1338
        %1603 = vmatpush1.bf16.msra.mxu0 %v1210
        %1604 = vmatprep.subr.bf16.mxu0 %v1337
        %1605 = vmatpush1.bf16.msra.mxu0 %v1209
        %1606 = vmatprep.subr.bf16.mxu0 %v1336
        %1607 = vmatpush1.bf16.msra.mxu0 %v1208
        %1608 = vmatprep.subr.bf16.mxu0 %v1335
        %1609 = vmatpush1.bf16.msra.mxu0 %v1207
        %1610 = vmatprep.subr.bf16.mxu0 0
        %1611 = vmatpush2.bf16.msra.mxu0 0
        %1612 = vmatprep.subr.bf16.mxu0 0
        %1613 = vmatpush2.bf16.msra.mxu0 0
        %1614 = vmatprep.subr.bf16.mxu0 0
        %1615 = vmatpush2.bf16.msra.mxu0 0
        %1616 = vmatprep.subr.bf16.mxu0 0
        %1617 = vmatpush2.bf16.msra.mxu0 0
        %1618 = vmatprep.subr.bf16.mxu0 0
        %1619 = vmatpush2.bf16.msra.mxu0 0
        %1620 = vmatprep.subr.bf16.mxu0 0
        %1621 = vmatpush2.bf16.msra.mxu0 0
        %1622 = vmatprep.subr.bf16.mxu0 0
        %1623 = vmatpush2.bf16.msra.mxu0 0
        %1624 = vmatprep.subr.bf16.mxu0 0
        %1625 = vmatpush2.bf16.msra.mxu0 0
        %1626 = vmatprep.mubr.bf16.mxu0 0
        %1627 = vmatmul.mubr.bf16.gmra.mxu0 %v297
        %v1628 = vpop.f32.mrf.mxu0
        %v1629 = vadd.f32 0.0, %v1628
        %v1630 = vpop.f32.mrf.mxu0
        %v1631 = vadd.f32 0.0, %v1630
        %v1632 = vpop.f32.mrf.mxu0
        %v1633 = vpop.f32.mrf.mxu0
        %1634 = vdwg.mxu0
        %1635 = vmatprep.subr.bf16.mxu0 0
        %1636 = vmatpush1.bf16.msra.mxu0 %v1470
        %1637 = vmatprep.subr.bf16.mxu0 0
        %1638 = vmatpush1.bf16.msra.mxu0 %v1469
        %1639 = vmatprep.subr.bf16.mxu0 0
        %1640 = vmatpush1.bf16.msra.mxu0 %v1468
        %1641 = vmatprep.subr.bf16.mxu0 0
        %1642 = vmatpush1.bf16.msra.mxu0 %v1467
        %1643 = vmatprep.subr.bf16.mxu0 0
        %1644 = vmatpush1.bf16.msra.mxu0 %v1466
        %1645 = vmatprep.subr.bf16.mxu0 0
        %1646 = vmatpush1.bf16.msra.mxu0 %v1465
        %1647 = vmatprep.subr.bf16.mxu0 0
        %1648 = vmatpush1.bf16.msra.mxu0 %v1464
        %1649 = vmatprep.subr.bf16.mxu0 0
        %1650 = vmatpush1.bf16.msra.mxu0 %v1463
        %1651 = vmatprep.subr.bf16.mxu0 0
        %1652 = vmatpush2.bf16.msra.mxu0 0
        %1653 = vmatprep.subr.bf16.mxu0 0
        %1654 = vmatpush2.bf16.msra.mxu0 0
        %1655 = vmatprep.subr.bf16.mxu0 0
        %1656 = vmatpush2.bf16.msra.mxu0 0
        %1657 = vmatprep.subr.bf16.mxu0 0
        %1658 = vmatpush2.bf16.msra.mxu0 0
        %1659 = vmatprep.subr.bf16.mxu0 0
        %1660 = vmatpush2.bf16.msra.mxu0 0
        %1661 = vmatprep.subr.bf16.mxu0 0
        %1662 = vmatpush2.bf16.msra.mxu0 0
        %1663 = vmatprep.subr.bf16.mxu0 0
        %1664 = vmatpush2.bf16.msra.mxu0 0
        %1665 = vmatprep.subr.bf16.mxu0 0
        %1666 = vmatpush2.bf16.msra.mxu0 0
        %1667 = vmatprep.mubr.bf16.mxu0 0
        %1668 = vmatmul.mubr.bf16.gmra.mxu0 %v297
        %v1669 = vpop.f32.mrf.mxu0
        %v1670 = vadd.f32 0.0, %v1669
        %v1671 = vpop.f32.mrf.mxu0
        %v1672 = vpop.f32.mrf.mxu0
        %v1673 = vpop.f32.mrf.mxu0
        %1674 = vdwg.mxu0
        %v1675 = vmax.f32 %v1506, %v1508
        %v1676 = vmax.f32 %v1675, %v1547
        %v1677 = vmax.f32 %v1676, %v1549
        %v1678 = vmax.f32 %v1677, %v1588
        %v1679 = vmax.f32 %v1678, %v1590
        %v1680 = vmax.f32 %v1679, %v1629
        %v1681 = vmax.f32 %v1680, %v1631
        %v1682 = vmax.f32 %v1681, %v1670
        %s1683 = smul.u32 %s24, 128
        %s1684 = sshra.s32 %s1683, 7
        %s1685 = sand.u32 %s1683, 127
        %s1686 = smul.addr %s1684, 4
        %s1687 = scalar_lea.vmem %s279, %s1686
        %v1688 = vld [vmem:[%s1687] sm:$0xf]
        %v1689 = vpack.c.bf16 %v1682, %v1682
        %v1691 = vrot.slane %v1689, 4
        %vm1692 = vcmask 1043456
        %v1695 = vsel %vm1692, %v1688, %v1691
        %v1697 = vld [vmem:[%s3] sm:$0xf]
        %v1698 = vld [vmem:[%s3 + $0x4] sm:$0xf]
        %v1699 = vld [vmem:[%s4] sm:$0xff]
        %v1700 = vld [vmem:[%s4 + $0x8] sm:$0xff]
        %1702 = vset.pattern.permute.xlu0 0
        %1703 = vperm.xlu0 %1702, %v1699
        %v1704 = vpop.permute.xlu0 %1703
        %1707 = vset.pattern.permute.xlu0 0
        %1708 = vperm.xlu0 %1707, %v1700
        %v1709 = vpop.permute.xlu0 %1708
        %v1713 = vunpack.c.l.b16 %v1697
        %v1714 = vunpack.c.l.b16 %v1698
        %v1715 = vpack.c.b16 %v1714, %v1713
        %vm1716 = vcmask 130048
        %v1718 = vsel %vm1716, %v1715, 0
        %1720 = vmatprep.subr.bf16.mxu0 0
        %1721 = vmatpush1.bf16.msra.mxu0 0
        %1722 = vmatprep.subr.bf16.mxu0 0
        %1723 = vmatpush1.bf16.msra.mxu0 0
        %1724 = vmatprep.subr.bf16.mxu0 0
        %1725 = vmatpush1.bf16.msra.mxu0 0
        %1726 = vmatprep.subr.bf16.mxu0 0
        %1727 = vmatpush1.bf16.msra.mxu0 0
        %1728 = vmatprep.subr.bf16.mxu0 0
        %1729 = vmatpush1.bf16.msra.mxu0 0
        %1730 = vmatprep.subr.bf16.mxu0 0
        %1731 = vmatpush1.bf16.msra.mxu0 0
        %1732 = vmatprep.subr.bf16.mxu0 0
        %1733 = vmatpush1.bf16.msra.mxu0 0
        %1734 = vmatprep.subr.bf16.mxu0 0
        %1735 = vmatpush1.bf16.msra.mxu0 %v1695
        %1736 = vmatprep.subr.bf16.mxu0 0
        %1737 = vmatpush2.bf16.msra.mxu0 0
        %1738 = vmatprep.subr.bf16.mxu0 0
        %1739 = vmatpush2.bf16.msra.mxu0 0
        %1740 = vmatprep.subr.bf16.mxu0 0
        %1741 = vmatpush2.bf16.msra.mxu0 0
        %1742 = vmatprep.subr.bf16.mxu0 0
        %1743 = vmatpush2.bf16.msra.mxu0 0
        %1744 = vmatprep.subr.bf16.mxu0 0
        %1745 = vmatpush2.bf16.msra.mxu0 0
        %1746 = vmatprep.subr.bf16.mxu0 0
        %1747 = vmatpush2.bf16.msra.mxu0 0
        %1748 = vmatprep.subr.bf16.mxu0 0
        %1749 = vmatpush2.bf16.msra.mxu0 0
        %1750 = vmatprep.subr.bf16.mxu0 0
        %1751 = vmatpush2.bf16.msra.mxu0 0
        %1752 = vmatprep.mubr.bf16.mxu0 0
        %1753 = vmatmul.mubr.bf16.gmra.mxu0 %v1718
        %v1754 = vpop.f32.mrf.mxu0
        %v1755 = vadd.f32 %v1704, %v1754
        %v1756 = vpop.f32.mrf.mxu0
        %v1757 = vpop.f32.mrf.mxu0
        %v1758 = vadd.f32 %v1709, %v1757
        %v1759 = vpop.f32.mrf.mxu0
        %1760 = vdwg.mxu0
        %v1761 = vmul.f32 %v1755, 0.5
        %v1762 = vmul.f32 %v1758, 0.5
        %v1763 = vmul.f32 %v1755, 0.044715
        %v1764 = vmul.f32 %v1758, 0.044715
        %v1765 = vmul.f32 %v1763, %v1755
        %v1766 = vmul.f32 %v1764, %v1758
        %v1767 = vmul.f32 %v1765, %v1755
        %v1768 = vmul.f32 %v1766, %v1758
        %v1769 = vadd.f32 %v1755, %v1767
        %v1770 = vadd.f32 %v1758, %v1768
        %v1771 = vmul.f32 %v1769, 0.7978846
        %v1772 = vmul.f32 %v1770, 0.7978846
        %v1773 = vtanh.pop %v1771
        %v1774 = vtanh.pop %v1772
        %v1775 = vadd.f32 %v1773, 1.0
        %v1776 = vadd.f32 %v1774, 1.0
        %v1777 = vmul.f32 %v1761, %v1775
        %v1778 = vmul.f32 %v1762, %v1776
        %1779 = vst [vmem:[%s275] sm:$0xff] %v1777
        %1780 = vst [vmem:[%s275 + $0x8] sm:$0xff] %v1778
        %s1781 = sand.u32 %s165, 1
        %s1782 = scalar_lea.sflag [#allocation3], %s1781
        %s1783 = sand.u32 %s165, 1
        %s1784 = smul.addr %s1783, 16
        %s1785 = scalar_lea.vmem [#allocation2], %s1784
        // Predicated region
        $region41: #{tpu_custom_call.1} parent=39 // pred_check
          %p1786 = pneg %p175
        $region42: #{tpu_custom_call.1} parent=39 // pred_check_branch
          %1788 = sbr.rel (%p1786) target = $region44
        $region43: #{tpu_custom_call.1} parent=39 // pred_region
          %s1790 = ssub.s32 256, 256
          %1791 = vsyncadd %s1782, %s1790
          %s1792 = smul.addr %s23, 2
          %s1793 = sadd.s32 %s24, %s1792
          %s1794 = smul.addr %s1793, 128
          %s1795 = scalar_lea.hbm %s5, %s1794
          %s1796 = sshll.u32 %s1785, 4
          %s1797 = int_to_ptr.vmem [resolvable:$true] %s1796
          %1802 = dma.vmem_to_hbm [thread:$0]  %s1797, 256, %s1795, %s1782, 128, 128, 8
        $region44: #{tpu_custom_call.1} parent=39 // pred_fallthru
          _
      $region40: #{tpu_custom_call.1} parent=5 // pred_fallthru
        _
      %p1803 = scmp.le.s32.totalorder 2, %s14
      // Predicated region
      $region45: #{tpu_custom_call.1} parent=5 // pred_check
        %p1804 = pneg %p1803
      $region46: #{tpu_custom_call.1} parent=5 // pred_check_branch
        %1806 = sbr.rel (%p1804) target = $region48
      $region47: #{tpu_custom_call.1} parent=5 // pred_region
        %s1807 = ssub.s32 %s14, 2
        // Predicated region
        $region49: #{tpu_custom_call.1} parent=47 // pred_check
          %p1808 = pneg %p181
        $region50: #{tpu_custom_call.1} parent=47 // pred_check_branch
          %1810 = sbr.rel (%p1808) target = $region52
        $region51: #{tpu_custom_call.1} parent=47 // pred_region
          %s1811 = sand.u32 %s166, 1
          %s1812 = scalar_lea.sflag [#allocation3], %s1811
          %s1813 = sand.u32 %s166, 1
          %s1814 = smul.addr %s1813, 16
          %s1815 = scalar_lea.vmem [#allocation2], %s1814
          %1816 = dma.done %s1812, 256
        $region52: #{tpu_custom_call.1} parent=47 // pred_fallthru
          _
      $region48: #{tpu_custom_call.1} parent=5 // pred_fallthru
        _
    $region6: #{tpu_custom_call.1} parent=1 // loop_footer
      %s18 = sadd.s32 1, %s14
    $region7: #{tpu_custom_call.1} parent=1 // loop_footer_branch
      %13 = sbr.rel target = $region3
    $region8: #{tpu_custom_call.1} parent=1 // loop_exit
      _
    %1817 = vsyncpa [#allocation3], 1
    %s1818 = scalar_lea.sflag [#allocation3], 1
    %1819 = vsyncpa %s1818, 1

</llo_original>
